<compile_context>
chip_gen: v7x
topology: tpu7x:2x2x1
jax: 0.10.0
libtpu: 0.0.40
codegen_flags: <defaults>
</compile_context>

<pallas_src>
import functools

import jax
import jax.numpy as jnp
from jax.experimental import pallas as pl
from jax.experimental.pallas import tpu as pltpu


def _attention_kernel(x_ref, wqkv_ref, bqkv_ref, wp_ref, bp_ref, o_ref, *,
                      num_heads, key_dim, d):
    nh_kd = num_heads * key_dim

    # x arrives in its natural NCHW (channel-major) layout: (C, N).
    x = x_ref[0].astype(jnp.bfloat16)                                   # (C, N) bf16

    # Fused 1x1 conv + BN for q|k|v, channel-major:
    #   (qkv_ch, C) @ (C, N) -> (qkv_ch, N); bf16 MXU, f32 accumulate, f32 bias.
    qkv = jnp.dot(wqkv_ref[...], x,
                  preferred_element_type=jnp.float32) + bqkv_ref[...]   # (qkv_ch, N) f32

    # One XLU transpose gives every head's queries row-major (queries on sublanes).
    q_t = qkv[:nh_kd, :].T                                              # (N, nh_kd) f32

    head_outs = []
    for h in range(num_heads):                                          # static unroll
        q = q_t[:, h * key_dim:(h + 1) * key_dim]                       # (N, kd)
        k = qkv[nh_kd + h * key_dim:nh_kd + (h + 1) * key_dim, :]       # (kd, N)
        v = qkv[2 * nh_kd + h * d:2 * nh_kd + (h + 1) * d, :]           # (d, N)

        # attn = q @ k (no scale in the reference forward), softmax over keys.
        s = jnp.dot(q, k, preferred_element_type=jnp.float32)           # (N_q, N_k)
        s = s - jnp.max(s, axis=-1, keepdims=True)
        p = jnp.exp(s)
        p = p * pl.reciprocal(jnp.sum(p, axis=-1, keepdims=True), approx=True)

        # Channel-major head output: v (d, N_k) contracted with p (N_q, N_k) over keys.
        head_outs.append(
            jax.lax.dot_general(v, p, (((1,), (1,)), ((), ())),
                                preferred_element_type=jnp.float32))    # (d, N_q)

    out = jnp.concatenate(head_outs, axis=0)                            # (dh, N), c = h*d+i
    out = jnp.maximum(out, 0.0)                                         # ReLU (f32)

    # Folded Conv2d_BN(dh -> dim), channel-major: (dim, dh) @ (dh, N) -> (dim, N).
    y = jnp.dot(wp_ref[...].astype(jnp.float32), out,
                preferred_element_type=jnp.float32) + bp_ref[...]       # (dim, N)
    o_ref[0] = y.astype(o_ref.dtype)


def attention_pallas(x_nchw, params, *, num_heads, key_dim, d):
    B, C, H, W = x_nchw.shape
    N = H * W
    dim = C
    nh_kd = num_heads * key_dim
    dh = num_heads * d
    qkv_ch = 2 * nh_kd + dh

    # NCHW -> (B, C, N): a free reshape — no transpose / cast passes outside the kernel.
    x = x_nchw.reshape(B, C, N)
    w_qkv = params["w_qkv"].astype(jnp.bfloat16)       # (qkv_ch, C)   (no-op: prepared bf16)
    b_qkv = params["b_qkv"].astype(jnp.float32)        # (qkv_ch, 1)
    wp = params["wp"].astype(jnp.bfloat16)             # (dim, dh)
    bp = params["bp"].astype(jnp.float32)              # (dim, 1)

    flops = 2 * B * N * (C * qkv_ch + num_heads * N * (key_dim + d) + dh * dim)
    transcendentals = B * num_heads * N * (N + 1)      # exp + softmax reciprocal
    bytes_accessed = (x.size * 4 + w_qkv.size * 2 + wp.size * 2
                      + b_qkv.size * 4 + bp.size * 4 + B * N * dim * 4)

    kernel = functools.partial(_attention_kernel, num_heads=num_heads,
                               key_dim=key_dim, d=d)

    out_cm = pl.pallas_call(
        kernel,
        out_shape=jax.ShapeDtypeStruct((B, dim, N), jnp.float32),
        grid_spec=pltpu.PrefetchScalarGridSpec(
            num_scalar_prefetch=0,
            grid=(B,),
            in_specs=[
                pl.BlockSpec((1, C, N), lambda b: (b, 0, 0)),     # x (per-batch block)
                pl.BlockSpec((qkv_ch, C), lambda b: (0, 0)),      # fused W_qkv (resident)
                pl.BlockSpec((qkv_ch, 1), lambda b: (0, 0)),      # fused b_qkv (resident)
                pl.BlockSpec((dim, dh), lambda b: (0, 0)),        # W_proj (resident)
                pl.BlockSpec((dim, 1), lambda b: (0, 0)),         # b_proj (resident)
            ],
            out_specs=pl.BlockSpec((1, dim, N), lambda b: (b, 0, 0)),
        ),
        compiler_params=pltpu.CompilerParams(
            dimension_semantics=("parallel",)),
        cost_estimate=pl.CostEstimate(
            flops=int(flops),
            transcendentals=int(transcendentals),
            bytes_accessed=int(bytes_accessed)),
    )(x, w_qkv, b_qkv, wp, bp)

    # (B, dim, N) is already NCHW channel-major -> free reshape to (B, dim, H, W).
    return out_cm.reshape(B, dim, H, W)


def _fold_conv_bn(w_conv, gamma, beta, mean, var, eps=1e-5):
    """Fold 1x1 conv (out,in) + eval-mode BN into (out,in) weight + (out,) bias."""
    scale = gamma / jnp.sqrt(var + eps)
    w = w_conv * scale[:, None]
    b = beta - mean * scale
    return w, b


def make_params(key, dim, key_dim, num_heads, attn_ratio):
    nh_kd = key_dim * num_heads
    d = int(attn_ratio * key_dim)
    dh = d * num_heads
    qkv_ch = 2 * nh_kd + dh

    ks = jax.random.split(key, 8)

    def bn_params(k, ch):
        k1, k2, k3, k4 = jax.random.split(k, 4)
        gamma = jax.random.uniform(k1, (ch,), minval=0.5, maxval=1.5)
        beta = jax.random.normal(k2, (ch,)) * 0.1
        mean = jax.random.normal(k3, (ch,)) * 0.1
        var = jax.random.uniform(k4, (ch,), minval=0.5, maxval=1.5)
        return gamma, beta, mean, var

    wq_c = jax.random.normal(ks[0], (nh_kd, dim)) * 0.1
    wk_c = jax.random.normal(ks[1], (nh_kd, dim)) * 0.1
    wv_c = jax.random.normal(ks[2], (dh, dim)) * 0.1
    wp_c = jax.random.normal(ks[3], (dim, dh)) * 0.1

    wq_f, bq_f = _fold_conv_bn(wq_c, *bn_params(ks[4], nh_kd))
    wk_f, bk_f = _fold_conv_bn(wk_c, *bn_params(ks[5], nh_kd))
    wv_f, bv_f = _fold_conv_bn(wv_c, *bn_params(ks[6], dh))
    # NOTE: the module inits the proj BN weight to 0 (bn_weight_init=0), which would
    # zero the output; random BN params are used so the kernel is actually exercised.
    wp_f, bp_f = _fold_conv_bn(wp_c, *bn_params(ks[7], dim))

    # Channel-major (out, in) layouts; q|k|v fused along output channels.  PyTorch's
    # channel order within each projection is head-major (c = h*key_dim + i), which
    # the kernel's per-head row slices rely on.
    params = dict(
        w_qkv=jnp.concatenate([wq_f, wk_f, wv_f], axis=0).astype(jnp.bfloat16),   # (qkv_ch, dim)
        b_qkv=jnp.concatenate([bq_f, bk_f, bv_f]).reshape(qkv_ch, 1).astype(jnp.float32),
        wp=wp_f.astype(jnp.bfloat16),                                              # (dim, dh)
        bp=bp_f.reshape(dim, 1).astype(jnp.float32),
    )
    return params, d


def reference_forward(x_nchw, params, *, num_heads, key_dim, d):
    """Pure-JAX reference with the PyTorch module's forward semantics.

    Mirrors the kernel's bf16 quantization of x / matmul weights (math in f32)
    so the comparison isolates kernel correctness from the bf16 cast.
    """
    B, C, H, W = x_nchw.shape
    N = H * W
    nh_kd = num_heads * key_dim

    x = x_nchw.reshape(B, C, N).astype(jnp.bfloat16).astype(jnp.float32)
    w_qkv = params["w_qkv"].astype(jnp.float32)        # bf16-rounded values, math in f32
    wp = params["wp"].astype(jnp.float32)

    qkv = jnp.einsum("oc,bcn->bon", w_qkv, x) + params["b_qkv"][None]   # (B, qkv_ch, N)
    q = qkv[:, :nh_kd].reshape(B, num_heads, key_dim, N)
    k = qkv[:, nh_kd:2 * nh_kd].reshape(B, num_heads, key_dim, N)
    v = qkv[:, 2 * nh_kd:].reshape(B, num_heads, d, N)

    attn = jnp.einsum("bhkq,bhkm->bhqm", q, k)          # no scale (matches module)
    attn = jax.nn.softmax(attn, axis=-1)
    out = jnp.einsum("bhqm,bhdm->bhdq", attn, v).reshape(B, num_heads * d, N)
    out = jnp.maximum(out, 0.0)
    y = jnp.einsum("od,bdn->bon", wp, out) + params["bp"][None]
    return y.reshape(B, C, H, W)


if __name__ == "__main__":
    # Small shapes consistent with the module.
    B, dim, H, W = 2, 32, 8, 8
    key_dim, num_heads, attn_ratio = 16, 4, 2

    key = jax.random.PRNGKey(0)
    kx, kp = jax.random.split(key)
    x = jax.random.normal(kx, (B, dim, H, W), dtype=jnp.float32)

    params, d = make_params(kp, dim, key_dim, num_heads, attn_ratio)

    run = functools.partial(attention_pallas, num_heads=num_heads, key_dim=key_dim, d=d)
    out = jax.jit(run)(x, params)
    out = jax.block_until_ready(out)

    ref = reference_forward(x, params, num_heads=num_heads, key_dim=key_dim, d=d)
    assert out.shape == (B, dim, H, W)
    # Tolerance covers the approximate EUP reciprocal in the softmax and f32
    # accumulation-order differences (bf16 quantization is mirrored in the reference).
    assert jnp.allclose(out, ref, rtol=5e-3, atol=5e-3), "mismatch vs. JAX reference"

    print("KERNEL_OK")
</pallas_src>

<mosaic_0001>
module attributes {stable_mosaic.version = 11 : i64} {
  func.func @_attention_kernel(%arg0: i32, %arg1: memref<1x32x64xf32, #tpu.memory_space<vmem>>, %arg2: memref<256x32xbf16, #tpu.memory_space<vmem>>, %arg3: memref<256x1xf32, #tpu.memory_space<vmem>>, %arg4: memref<32x128xbf16, #tpu.memory_space<vmem>>, %arg5: memref<32x1xf32, #tpu.memory_space<vmem>>, %arg6: memref<1x32x64xf32, #tpu.memory_space<vmem>>) attributes {dimension_semantics = [#tpu.dimension_semantics<parallel>], iteration_bounds = array<i64: 2>, scalar_prefetch = 0 : i64, scratch_operands = 0 : i64, tpu.core_type = #tpu.core_type<tc>, window_params = [{transform_indices = @transform_0, window_bounds = array<i64: 1, 32, 64>}, {pipeline_mode = #tpu.pipeline_mode<synchronous>, transform_indices = @transform_1, window_bounds = array<i64: 256, 32>}, {pipeline_mode = #tpu.pipeline_mode<synchronous>, transform_indices = @transform_2, window_bounds = array<i64: 256, 1>}, {pipeline_mode = #tpu.pipeline_mode<synchronous>, transform_indices = @transform_3, window_bounds = array<i64: 32, 128>}, {pipeline_mode = #tpu.pipeline_mode<synchronous>, transform_indices = @transform_4, window_bounds = array<i64: 32, 1>}, {transform_indices = @transform_5, window_bounds = array<i64: 1, 32, 64>}]} {
    %c0 = arith.constant 0 : index
    %c0_0 = arith.constant 0 : index
    %c0_1 = arith.constant 0 : index
    %0 = vector.load %arg1[%c0, %c0_0, %c0_1] : memref<1x32x64xf32, #tpu.memory_space<vmem>>, vector<1x32x64xf32>
    %1 = vector.shape_cast %0 : vector<1x32x64xf32> to vector<32x64xf32>
    %2 = arith.truncf %1 : vector<32x64xf32> to vector<32x64xbf16>
    %c0_2 = arith.constant 0 : index
    %c0_3 = arith.constant 0 : index
    %3 = vector.load %arg2[%c0_2, %c0_3] : memref<256x32xbf16, #tpu.memory_space<vmem>>, vector<256x32xbf16>
    %cst = arith.constant dense<0.000000e+00> : vector<256x64xf32>
    %4 = tpu.matmul %3, %2, %cst {dimension_numbers = #tpu.dot_dimension_numbers<[1], [0], [0], [1], [0, 0, 1, 1], [], []>} : vector<256x32xbf16>, vector<32x64xbf16>, vector<256x64xf32> -> vector<256x64xf32>
    %c0_4 = arith.constant 0 : index
    %c0_5 = arith.constant 0 : index
    %5 = vector.load %arg3[%c0_4, %c0_5] : memref<256x1xf32, #tpu.memory_space<vmem>>, vector<256x1xf32>
    %6 = vector.broadcast %5 : vector<256x1xf32> to vector<256x64xf32>
    %7 = arith.addf %4, %6 : vector<256x64xf32>
    %8 = vector.extract_strided_slice %7 {offsets = [0, 0], sizes = [64, 64], strides = [1, 1]} : vector<256x64xf32> to vector<64x64xf32>
    %9 = tpu.transpose %8, [1, 0] : vector<64x64xf32> -> vector<64x64xf32>
    %10 = vector.extract_strided_slice %9 {offsets = [0, 0], sizes = [64, 16], strides = [1, 1]} : vector<64x64xf32> to vector<64x16xf32>
    %11 = vector.extract_strided_slice %7 {offsets = [64, 0], sizes = [16, 64], strides = [1, 1]} : vector<256x64xf32> to vector<16x64xf32>
    %12 = vector.extract_strided_slice %7 {offsets = [128, 0], sizes = [32, 64], strides = [1, 1]} : vector<256x64xf32> to vector<32x64xf32>
    %cst_6 = arith.constant dense<0.000000e+00> : vector<64x64xf32>
    %13 = tpu.matmul %10, %11, %cst_6 {dimension_numbers = #tpu.dot_dimension_numbers<[1], [0], [0], [1], [0, 0, 1, 1], [], []>} : vector<64x16xf32>, vector<16x64xf32>, vector<64x64xf32> -> vector<64x64xf32>
    %cst_7 = arith.constant dense<0xFF800000> : vector<64xf32>
    %14 = vector.multi_reduction <maximumf>, %13, %cst_7 [1] : vector<64x64xf32> to vector<64xf32>
    %15 = vector.shape_cast %14 : vector<64xf32> to vector<64x1xf32>
    %16 = vector.broadcast %15 : vector<64x1xf32> to vector<64x64xf32>
    %17 = arith.subf %13, %16 : vector<64x64xf32>
    %18 = math.exp %17 : vector<64x64xf32>
    %cst_8 = arith.constant dense<0.000000e+00> : vector<64xf32>
    %19 = vector.multi_reduction <add>, %18, %cst_8 [1] : vector<64x64xf32> to vector<64xf32>
    %20 = vector.shape_cast %19 : vector<64xf32> to vector<64x1xf32>
    %21 = tpu.reciprocal %20 {approx = true} : vector<64x1xf32> -> vector<64x1xf32>
    %22 = vector.broadcast %21 : vector<64x1xf32> to vector<64x64xf32>
    %23 = arith.mulf %18, %22 : vector<64x64xf32>
    %cst_9 = arith.constant dense<0.000000e+00> : vector<32x64xf32>
    %24 = tpu.matmul %12, %23, %cst_9 {dimension_numbers = #tpu.dot_dimension_numbers<[1], [1], [0], [0], [0, 0, 1, 0], [], []>} : vector<32x64xf32>, vector<64x64xf32>, vector<32x64xf32> -> vector<32x64xf32>
    %25 = vector.extract_strided_slice %9 {offsets = [0, 16], sizes = [64, 16], strides = [1, 1]} : vector<64x64xf32> to vector<64x16xf32>
    %26 = vector.extract_strided_slice %7 {offsets = [80, 0], sizes = [16, 64], strides = [1, 1]} : vector<256x64xf32> to vector<16x64xf32>
    %27 = vector.extract_strided_slice %7 {offsets = [160, 0], sizes = [32, 64], strides = [1, 1]} : vector<256x64xf32> to vector<32x64xf32>
    %cst_10 = arith.constant dense<0.000000e+00> : vector<64x64xf32>
    %28 = tpu.matmul %25, %26, %cst_10 {dimension_numbers = #tpu.dot_dimension_numbers<[1], [0], [0], [1], [0, 0, 1, 1], [], []>} : vector<64x16xf32>, vector<16x64xf32>, vector<64x64xf32> -> vector<64x64xf32>
    %cst_11 = arith.constant dense<0xFF800000> : vector<64xf32>
    %29 = vector.multi_reduction <maximumf>, %28, %cst_11 [1] : vector<64x64xf32> to vector<64xf32>
    %30 = vector.shape_cast %29 : vector<64xf32> to vector<64x1xf32>
    %31 = vector.broadcast %30 : vector<64x1xf32> to vector<64x64xf32>
    %32 = arith.subf %28, %31 : vector<64x64xf32>
    %33 = math.exp %32 : vector<64x64xf32>
    %cst_12 = arith.constant dense<0.000000e+00> : vector<64xf32>
    %34 = vector.multi_reduction <add>, %33, %cst_12 [1] : vector<64x64xf32> to vector<64xf32>
    %35 = vector.shape_cast %34 : vector<64xf32> to vector<64x1xf32>
    %36 = tpu.reciprocal %35 {approx = true} : vector<64x1xf32> -> vector<64x1xf32>
    %37 = vector.broadcast %36 : vector<64x1xf32> to vector<64x64xf32>
    %38 = arith.mulf %33, %37 : vector<64x64xf32>
    %cst_13 = arith.constant dense<0.000000e+00> : vector<32x64xf32>
    %39 = tpu.matmul %27, %38, %cst_13 {dimension_numbers = #tpu.dot_dimension_numbers<[1], [1], [0], [0], [0, 0, 1, 0], [], []>} : vector<32x64xf32>, vector<64x64xf32>, vector<32x64xf32> -> vector<32x64xf32>
    %40 = vector.extract_strided_slice %9 {offsets = [0, 32], sizes = [64, 16], strides = [1, 1]} : vector<64x64xf32> to vector<64x16xf32>
    %41 = vector.extract_strided_slice %7 {offsets = [96, 0], sizes = [16, 64], strides = [1, 1]} : vector<256x64xf32> to vector<16x64xf32>
    %42 = vector.extract_strided_slice %7 {offsets = [192, 0], sizes = [32, 64], strides = [1, 1]} : vector<256x64xf32> to vector<32x64xf32>
    %cst_14 = arith.constant dense<0.000000e+00> : vector<64x64xf32>
    %43 = tpu.matmul %40, %41, %cst_14 {dimension_numbers = #tpu.dot_dimension_numbers<[1], [0], [0], [1], [0, 0, 1, 1], [], []>} : vector<64x16xf32>, vector<16x64xf32>, vector<64x64xf32> -> vector<64x64xf32>
    %cst_15 = arith.constant dense<0xFF800000> : vector<64xf32>
    %44 = vector.multi_reduction <maximumf>, %43, %cst_15 [1] : vector<64x64xf32> to vector<64xf32>
    %45 = vector.shape_cast %44 : vector<64xf32> to vector<64x1xf32>
    %46 = vector.broadcast %45 : vector<64x1xf32> to vector<64x64xf32>
    %47 = arith.subf %43, %46 : vector<64x64xf32>
    %48 = math.exp %47 : vector<64x64xf32>
    %cst_16 = arith.constant dense<0.000000e+00> : vector<64xf32>
    %49 = vector.multi_reduction <add>, %48, %cst_16 [1] : vector<64x64xf32> to vector<64xf32>
    %50 = vector.shape_cast %49 : vector<64xf32> to vector<64x1xf32>
    %51 = tpu.reciprocal %50 {approx = true} : vector<64x1xf32> -> vector<64x1xf32>
    %52 = vector.broadcast %51 : vector<64x1xf32> to vector<64x64xf32>
    %53 = arith.mulf %48, %52 : vector<64x64xf32>
    %cst_17 = arith.constant dense<0.000000e+00> : vector<32x64xf32>
    %54 = tpu.matmul %42, %53, %cst_17 {dimension_numbers = #tpu.dot_dimension_numbers<[1], [1], [0], [0], [0, 0, 1, 0], [], []>} : vector<32x64xf32>, vector<64x64xf32>, vector<32x64xf32> -> vector<32x64xf32>
    %55 = vector.extract_strided_slice %9 {offsets = [0, 48], sizes = [64, 16], strides = [1, 1]} : vector<64x64xf32> to vector<64x16xf32>
    %56 = vector.extract_strided_slice %7 {offsets = [112, 0], sizes = [16, 64], strides = [1, 1]} : vector<256x64xf32> to vector<16x64xf32>
    %57 = vector.extract_strided_slice %7 {offsets = [224, 0], sizes = [32, 64], strides = [1, 1]} : vector<256x64xf32> to vector<32x64xf32>
    %cst_18 = arith.constant dense<0.000000e+00> : vector<64x64xf32>
    %58 = tpu.matmul %55, %56, %cst_18 {dimension_numbers = #tpu.dot_dimension_numbers<[1], [0], [0], [1], [0, 0, 1, 1], [], []>} : vector<64x16xf32>, vector<16x64xf32>, vector<64x64xf32> -> vector<64x64xf32>
    %cst_19 = arith.constant dense<0xFF800000> : vector<64xf32>
    %59 = vector.multi_reduction <maximumf>, %58, %cst_19 [1] : vector<64x64xf32> to vector<64xf32>
    %60 = vector.shape_cast %59 : vector<64xf32> to vector<64x1xf32>
    %61 = vector.broadcast %60 : vector<64x1xf32> to vector<64x64xf32>
    %62 = arith.subf %58, %61 : vector<64x64xf32>
    %63 = math.exp %62 : vector<64x64xf32>
    %cst_20 = arith.constant dense<0.000000e+00> : vector<64xf32>
    %64 = vector.multi_reduction <add>, %63, %cst_20 [1] : vector<64x64xf32> to vector<64xf32>
    %65 = vector.shape_cast %64 : vector<64xf32> to vector<64x1xf32>
    %66 = tpu.reciprocal %65 {approx = true} : vector<64x1xf32> -> vector<64x1xf32>
    %67 = vector.broadcast %66 : vector<64x1xf32> to vector<64x64xf32>
    %68 = arith.mulf %63, %67 : vector<64x64xf32>
    %cst_21 = arith.constant dense<0.000000e+00> : vector<32x64xf32>
    %69 = tpu.matmul %57, %68, %cst_21 {dimension_numbers = #tpu.dot_dimension_numbers<[1], [1], [0], [0], [0, 0, 1, 0], [], []>} : vector<32x64xf32>, vector<64x64xf32>, vector<32x64xf32> -> vector<32x64xf32>
    %70 = tpu.concatenate %24, %39, %54, %69 in 0 : vector<32x64xf32>, vector<32x64xf32>, vector<32x64xf32>, vector<32x64xf32> -> vector<128x64xf32>
    %cst_22 = arith.constant 0.000000e+00 : f32
    %71 = vector.broadcast %cst_22 : f32 to vector<128x64xf32>
    %72 = arith.maximumf %70, %71 : vector<128x64xf32>
    %c0_23 = arith.constant 0 : index
    %c0_24 = arith.constant 0 : index
    %73 = vector.load %arg4[%c0_23, %c0_24] : memref<32x128xbf16, #tpu.memory_space<vmem>>, vector<32x128xbf16>
    %74 = arith.extf %73 : vector<32x128xbf16> to vector<32x128xf32>
    %cst_25 = arith.constant dense<0.000000e+00> : vector<32x64xf32>
    %75 = tpu.matmul %74, %72, %cst_25 {dimension_numbers = #tpu.dot_dimension_numbers<[1], [0], [0], [1], [0, 0, 1, 1], [], []>} : vector<32x128xf32>, vector<128x64xf32>, vector<32x64xf32> -> vector<32x64xf32>
    %c0_26 = arith.constant 0 : index
    %c0_27 = arith.constant 0 : index
    %76 = vector.load %arg5[%c0_26, %c0_27] : memref<32x1xf32, #tpu.memory_space<vmem>>, vector<32x1xf32>
    %77 = vector.broadcast %76 : vector<32x1xf32> to vector<32x64xf32>
    %78 = arith.addf %75, %77 : vector<32x64xf32>
    %c0_28 = arith.constant 0 : index
    %c0_29 = arith.constant 0 : index
    %c0_30 = arith.constant 0 : index
    %79 = vector.load %arg6[%c0_28, %c0_29, %c0_30] : memref<1x32x64xf32, #tpu.memory_space<vmem>>, vector<1x32x64xf32>
    %80 = vector.shape_cast %79 : vector<1x32x64xf32> to vector<32x64xf32>
    %81 = vector.shape_cast %78 : vector<32x64xf32> to vector<1x32x64xf32>
    tpu.vector_store %arg6[%c0_28, %c0_29, %c0_30], %81 {strides = array<i32>} : memref<1x32x64xf32, #tpu.memory_space<vmem>>, vector<1x32x64xf32>,
    return
  }
  func.func @transform_0(%arg0: i32) -> (i32, i32, i32) {
    %c0_i32 = arith.constant 0 : i32
    %c0_i32_0 = arith.constant 0 : i32
    %c0_i32_1 = arith.constant 0 : i32
    return %arg0, %c0_i32, %c0_i32_0 : i32, i32, i32
  }
  func.func @transform_1(%arg0: i32) -> (i32, i32) {
    %c0_i32 = arith.constant 0 : i32
    %c0_i32_0 = arith.constant 0 : i32
    %c0_i32_1 = arith.constant 0 : i32
    return %c0_i32, %c0_i32_0 : i32, i32
  }
  func.func @transform_2(%arg0: i32) -> (i32, i32) {
    %c0_i32 = arith.constant 0 : i32
    %c0_i32_0 = arith.constant 0 : i32
    %c0_i32_1 = arith.constant 0 : i32
    return %c0_i32, %c0_i32_0 : i32, i32
  }
  func.func @transform_3(%arg0: i32) -> (i32, i32) {
    %c0_i32 = arith.constant 0 : i32
    %c0_i32_0 = arith.constant 0 : i32
    %c0_i32_1 = arith.constant 0 : i32
    return %c0_i32, %c0_i32_0 : i32, i32
  }
  func.func @transform_4(%arg0: i32) -> (i32, i32) {
    %c0_i32 = arith.constant 0 : i32
    %c0_i32_0 = arith.constant 0 : i32
    %c0_i32_1 = arith.constant 0 : i32
    return %c0_i32, %c0_i32_0 : i32, i32
  }
  func.func @transform_5(%arg0: i32) -> (i32, i32, i32) {
    %c0_i32 = arith.constant 0 : i32
    %c0_i32_0 = arith.constant 0 : i32
    %c0_i32_1 = arith.constant 0 : i32
    return %arg0, %c0_i32, %c0_i32_0 : i32, i32, i32
  }
}

</mosaic_0001>

<llo_original>
// kernel: attention_pallas.1
$region0: #{attention_pallas.1}
  #allocation0 [shape = 'u32[]', space=smem, size = 0x4, offset = 0x4, fixed_abs, tag = 'smem constant byte address 0x4 - core index']
  #allocation1 [shape = 'u32[144,128]{1,0:T(1,128)}', space=vmem, size = 0x12000, scoped, tag = 'internal scratch']
  %s0 = inlined_call_operand.vmem [shape: f32[2,32,64], index: 0, kind: input, shape index: {}]
  %s1 = inlined_call_operand.vmem [shape: bf16[256,32], index: 1, kind: input, shape index: {}]
  %s2 = inlined_call_operand.vmem [shape: f32[256,1], index: 2, kind: input, shape index: {}]
  %s3 = inlined_call_operand.vmem [shape: bf16[32,128], index: 3, kind: input, shape index: {}]
  %s4 = inlined_call_operand.vmem [shape: f32[32,1], index: 4, kind: input, shape index: {}]
  %s5 = inlined_call_operand.vmem [shape: f32[2,32,64], index: 5, kind: output, shape index: {}]
  %s6 = sld [smem:[#allocation0]]
  $region53: #{attention_pallas.1} parent=0
    _
  %s8 = ssub.s32 1, %s6
  %s9 = scalar_select 0, %s8, %s6
  loop: start=0, step=1, limit=4
  $region2: #{attention_pallas.1} parent=0 // loop_pre_header
    _
  $region3: #{attention_pallas.1} parent=0 // loop_header
    %s11 = sphi 0, %s15
    %p12 = scmp.ge.s32.totalorder %s11, 4
    %s21 = sphi 0, %s23
    %s24 = sphi 0, %s21
    %s25 = sphi 0, %s24
    %s41 = sphi 0, %s25
    %s45 = sphi 0, %s45
    %s47 = sphi 0, %s45
    %s48 = sphi 0, %s47
    %s62 = sphi 0, %s48
    %s66 = sphi 0, %s66
    %s68 = sphi 0, %s66
    %s69 = sphi 0, %s68
    %s83 = sphi 0, %s69
    %s87 = sphi 0, %s87
    %s89 = sphi 0, %s87
    %s90 = sphi 0, %s89
    %s104 = sphi 0, %s90
    %s108 = sphi 0, %s108
    %s110 = sphi 0, %s108
    %s111 = sphi 0, %s110
    %s125 = sphi 0, %s111
    %s131 = sphi 0, %s133
    %s134 = sphi 0, %s131
    %s135 = sphi 0, %s134
    %s151 = sphi 0, %s135
  $region4: #{attention_pallas.1} parent=0 // loop_header_branch
    %14 = sbr.rel (%p12) target = $region8
  $region5: #{attention_pallas.1} parent=0 // loop_body
    %s16 = ssub.s32 %s11, 1
    %s17 = ssub.s32 %s11, 2
    %s18 = sadd.s32 %s11, 1
    %s19 = ssub.s32 %s11, %s18
    %p20 = scmp.eq.s32.totalorder %s19, 0
    %s22 = sadd.s32 %s21, 1
    %s23 = scalar_select %p20, %s21, %s22
    %p26 = pneg %p20
    %p27 = scmp.eq.s32.totalorder %s11, 1
    %p28 = por %p26, %p27
    %p29 = scmp.ne.s32.totalorder %s21, %s24
    %p30 = scmp.eq.s32.totalorder %s11, 0
    %p31 = por %p29, %p30
    %p32 = scmp.ne.s32.totalorder %s21, %s24
    %p33 = scmp.eq.s32.totalorder %s16, 1
    %p34 = por %p32, %p33
    %p35 = scmp.ne.s32.totalorder %s24, %s25
    %p36 = scmp.eq.s32.totalorder %s16, 0
    %p37 = por %p35, %p36
    %p38 = scmp.ne.s32.totalorder %s24, %s25
    %p39 = scmp.eq.s32.totalorder %s17, 1
    %p40 = por %p38, %p39
    %p42 = scmp.ne.s32.totalorder %s25, %s41
    %p43 = scmp.eq.s32.totalorder %s17, 0
    %p44 = por %p42, %p43
    %s46 = sadd.s32 %s45, 1
    %p49 = scmp.eq.s32.totalorder %s11, 1
    %p50 = scmp.ne.s32.totalorder %s45, %s47
    %p51 = scmp.eq.s32.totalorder %s11, 0
    %p52 = por %p50, %p51
    %p53 = scmp.ne.s32.totalorder %s45, %s47
    %p54 = scmp.eq.s32.totalorder %s16, 1
    %p55 = por %p53, %p54
    %p56 = scmp.ne.s32.totalorder %s47, %s48
    %p57 = scmp.eq.s32.totalorder %s16, 0
    %p58 = por %p56, %p57
    %p59 = scmp.ne.s32.totalorder %s47, %s48
    %p60 = scmp.eq.s32.totalorder %s17, 1
    %p61 = por %p59, %p60
    %p63 = scmp.ne.s32.totalorder %s48, %s62
    %p64 = scmp.eq.s32.totalorder %s17, 0
    %p65 = por %p63, %p64
    %s67 = sadd.s32 %s66, 1
    %p70 = scmp.eq.s32.totalorder %s11, 1
    %p71 = scmp.ne.s32.totalorder %s66, %s68
    %p72 = scmp.eq.s32.totalorder %s11, 0
    %p73 = por %p71, %p72
    %p74 = scmp.ne.s32.totalorder %s66, %s68
    %p75 = scmp.eq.s32.totalorder %s16, 1
    %p76 = por %p74, %p75
    %p77 = scmp.ne.s32.totalorder %s68, %s69
    %p78 = scmp.eq.s32.totalorder %s16, 0
    %p79 = por %p77, %p78
    %p80 = scmp.ne.s32.totalorder %s68, %s69
    %p81 = scmp.eq.s32.totalorder %s17, 1
    %p82 = por %p80, %p81
    %p84 = scmp.ne.s32.totalorder %s69, %s83
    %p85 = scmp.eq.s32.totalorder %s17, 0
    %p86 = por %p84, %p85
    %s88 = sadd.s32 %s87, 1
    %p91 = scmp.eq.s32.totalorder %s11, 1
    %p92 = scmp.ne.s32.totalorder %s87, %s89
    %p93 = scmp.eq.s32.totalorder %s11, 0
    %p94 = por %p92, %p93
    %p95 = scmp.ne.s32.totalorder %s87, %s89
    %p96 = scmp.eq.s32.totalorder %s16, 1
    %p97 = por %p95, %p96
    %p98 = scmp.ne.s32.totalorder %s89, %s90
    %p99 = scmp.eq.s32.totalorder %s16, 0
    %p100 = por %p98, %p99
    %p101 = scmp.ne.s32.totalorder %s89, %s90
    %p102 = scmp.eq.s32.totalorder %s17, 1
    %p103 = por %p101, %p102
    %p105 = scmp.ne.s32.totalorder %s90, %s104
    %p106 = scmp.eq.s32.totalorder %s17, 0
    %p107 = por %p105, %p106
    %s109 = sadd.s32 %s108, 1
    %p112 = scmp.eq.s32.totalorder %s11, 1
    %p113 = scmp.ne.s32.totalorder %s108, %s110
    %p114 = scmp.eq.s32.totalorder %s11, 0
    %p115 = por %p113, %p114
    %p116 = scmp.ne.s32.totalorder %s108, %s110
    %p117 = scmp.eq.s32.totalorder %s16, 1
    %p118 = por %p116, %p117
    %p119 = scmp.ne.s32.totalorder %s110, %s111
    %p120 = scmp.eq.s32.totalorder %s16, 0
    %p121 = por %p119, %p120
    %p122 = scmp.ne.s32.totalorder %s110, %s111
    %p123 = scmp.eq.s32.totalorder %s17, 1
    %p124 = por %p122, %p123
    %p126 = scmp.ne.s32.totalorder %s111, %s125
    %p127 = scmp.eq.s32.totalorder %s17, 0
    %p128 = por %p126, %p127
    %s129 = ssub.s32 %s11, %s18
    %p130 = scmp.eq.s32.totalorder %s129, 0
    %s132 = sadd.s32 %s131, 1
    %s133 = scalar_select %p130, %s131, %s132
    %p136 = pneg %p130
    %p137 = scmp.eq.s32.totalorder %s11, 1
    %p138 = por %p136, %p137
    %p139 = scmp.ne.s32.totalorder %s131, %s134
    %p140 = scmp.eq.s32.totalorder %s11, 0
    %p141 = por %p139, %p140
    %p142 = scmp.ne.s32.totalorder %s131, %s134
    %p143 = scmp.eq.s32.totalorder %s16, 1
    %p144 = por %p142, %p143
    %p145 = scmp.ne.s32.totalorder %s134, %s135
    %p146 = scmp.eq.s32.totalorder %s16, 0
    %p147 = por %p145, %p146
    %p148 = scmp.ne.s32.totalorder %s134, %s135
    %p149 = scmp.eq.s32.totalorder %s17, 1
    %p150 = por %p148, %p149
    %p152 = scmp.ne.s32.totalorder %s135, %s151
    %p153 = scmp.eq.s32.totalorder %s17, 0
    %p154 = por %p152, %p153
    %p155 = scmp.le.s32.totalorder 1, %s11
    %p156 = scmp.lt.s32.totalorder %s11, 3
    %p157 = pnand %p155, %p156
    %p158 = pneg %p157
    // Predicated region
    $region9: #{attention_pallas.1} parent=5 // pred_check
      _
    $region10: #{attention_pallas.1} parent=5 // pred_check_branch
      %160 = sbr.rel (%p157) target = $region12
    $region11: #{attention_pallas.1} parent=5 // pred_region
      %s161 = ssub.s32 %s11, 1
      // Predicated region
      $region13: #{attention_pallas.1} parent=11 // pred_check
        %p162 = pneg %p58
      $region14: #{attention_pallas.1} parent=11 // pred_check_branch
        %164 = sbr.rel (%p162) target = $region16
      $region15: #{attention_pallas.1} parent=11 // pred_region
        _
      $region16: #{attention_pallas.1} parent=11 // pred_fallthru
        _
      // Predicated region
      $region17: #{attention_pallas.1} parent=11 // pred_check
        %p165 = pneg %p79
      $region18: #{attention_pallas.1} parent=11 // pred_check_branch
        %167 = sbr.rel (%p165) target = $region20
      $region19: #{attention_pallas.1} parent=11 // pred_region
        _
      $region20: #{attention_pallas.1} parent=11 // pred_fallthru
        _
      // Predicated region
      $region21: #{attention_pallas.1} parent=11 // pred_check
        %p168 = pneg %p100
      $region22: #{attention_pallas.1} parent=11 // pred_check_branch
        %170 = sbr.rel (%p168) target = $region24
      $region23: #{attention_pallas.1} parent=11 // pred_region
        _
      $region24: #{attention_pallas.1} parent=11 // pred_fallthru
        _
      // Predicated region
      $region25: #{attention_pallas.1} parent=11 // pred_check
        %p171 = pneg %p121
      $region26: #{attention_pallas.1} parent=11 // pred_check_branch
        %173 = sbr.rel (%p171) target = $region28
      $region27: #{attention_pallas.1} parent=11 // pred_region
        _
      $region28: #{attention_pallas.1} parent=11 // pred_fallthru
        _
    $region12: #{attention_pallas.1} parent=5 // pred_fallthru
      _
    %p174 = scmp.lt.s32.totalorder %s11, 2
    // Predicated region
    $region29: #{attention_pallas.1} parent=5 // pred_check
      %p175 = pneg %p174
    $region30: #{attention_pallas.1} parent=5 // pred_check_branch
      %177 = sbr.rel (%p175) target = $region32
    $region31: #{attention_pallas.1} parent=5 // pred_region
      // Predicated region
      $region33: #{attention_pallas.1} parent=31 // pred_check
        %p178 = pneg %p31
      $region34: #{attention_pallas.1} parent=31 // pred_check_branch
        %180 = sbr.rel (%p178) target = $region36
      $region35: #{attention_pallas.1} parent=31 // pred_region
        %p181 = scmp.lt.s32.totalorder %s11, 1
        %s182 = scalar_select %p181, %s11, 1
        %s183 = smul.addr %s182, 4
        %s184 = smul.addr %s183, 8
        %s185 = scalar_lea.vmem %s0, %s184
      $region36: #{attention_pallas.1} parent=31 // pred_fallthru
        _
    $region32: #{attention_pallas.1} parent=5 // pred_fallthru
      _
    %p186 = scmp.le.s32.totalorder 1, %s11
    %p187 = scmp.lt.s32.totalorder %s11, 3
    %p188 = pnand %p186, %p187
    %p189 = pneg %p188
    // Predicated region
    $region37: #{attention_pallas.1} parent=5 // pred_check
      _
    $region38: #{attention_pallas.1} parent=5 // pred_check_branch
      %191 = sbr.rel (%p188) target = $region40
    $region39: #{attention_pallas.1} parent=5 // pred_region
      %s192 = ssub.s32 %s11, 1
      %p193 = scmp.lt.s32.totalorder %s16, 1
      %s194 = scalar_select %p193, %s16, 1
      %s195 = smul.addr %s194, 4
      %s196 = smul.addr %s195, 8
      %s197 = scalar_lea.vmem %s0, %s196
      %p198 = pneg %p37
      %p199 = pneg %p34
      %p200 = pneg %p58
      %p201 = pneg %p55
      %p202 = pneg %p79
      %p203 = pneg %p76
      %p204 = pneg %p100
      %p205 = pneg %p97
      %p206 = pneg %p121
      %p207 = pneg %p118
      %p208 = pneg %p147
      %p209 = pneg %p144
      %p210 = scmp.lt.s32.totalorder %s16, 1
      %s211 = scalar_select %p210, %s16, 1
      %s212 = smul.addr %s211, 4
      %s213 = smul.addr %s212, 8
      %s214 = scalar_lea.vmem %s5, %s213
      %p215 = scmp.lt.s32.totalorder %s16, 1
      %s216 = scalar_select %p215, %s16, 1
      %s217 = smul.addr %s216, 4
      %s218 = smul.addr %s217, 8
      %s219 = scalar_lea.vmem %s0, %s218
      %p220 = scmp.lt.s32.totalorder %s16, 1
      %s221 = scalar_select %p220, %s16, 1
      %s222 = smul.addr %s221, 4
      %s223 = smul.addr %s222, 8
      %s224 = scalar_lea.vmem %s5, %s223
      %v226 = vld [vmem:[%s219] sm:$0xff]
      %v227 = vld [vmem:[%s219 + $0x8] sm:$0xff]
      %v228 = vld [vmem:[%s219 + $0x10] sm:$0xff]
      %v229 = vld [vmem:[%s219 + $0x18] sm:$0xff]
      %v230 = vpack.c.bf16 %v227, %v226
      %v231 = vpack.c.bf16 %v229, %v228
      %v232 = vld [vmem:[%s1] sm:$0xf]
      %v233 = vld [vmem:[%s1 + $0x4] sm:$0xf]
      %v234 = vld [vmem:[%s1 + $0x8] sm:$0xf]
      %v235 = vld [vmem:[%s1 + $0xc] sm:$0xf]
      %v236 = vld [vmem:[%s1 + $0x10] sm:$0xf]
      %v237 = vld [vmem:[%s1 + $0x14] sm:$0xf]
      %v238 = vld [vmem:[%s1 + $0x18] sm:$0xf]
      %v239 = vld [vmem:[%s1 + $0x1c] sm:$0xf]
      %v240 = vld [vmem:[%s1 + $0x20] sm:$0xf]
      %v241 = vld [vmem:[%s1 + $0x24] sm:$0xf]
      %v242 = vld [vmem:[%s1 + $0x28] sm:$0xf]
      %v243 = vld [vmem:[%s1 + $0x2c] sm:$0xf]
      %v244 = vld [vmem:[%s1 + $0x30] sm:$0xf]
      %v245 = vld [vmem:[%s1 + $0x34] sm:$0xf]
      %v246 = vld [vmem:[%s1 + $0x38] sm:$0xf]
      %v247 = vld [vmem:[%s1 + $0x3c] sm:$0xf]
      %v248 = vld [vmem:[%s1 + $0x40] sm:$0xf]
      %v249 = vld [vmem:[%s1 + $0x44] sm:$0xf]
      %v250 = vld [vmem:[%s1 + $0x48] sm:$0xf]
      %v251 = vld [vmem:[%s1 + $0x4c] sm:$0xf]
      %v252 = vld [vmem:[%s1 + $0x50] sm:$0xf]
      %v253 = vld [vmem:[%s1 + $0x54] sm:$0xf]
      %v254 = vld [vmem:[%s1 + $0x58] sm:$0xf]
      %v255 = vld [vmem:[%s1 + $0x5c] sm:$0xf]
      %v256 = vld [vmem:[%s1 + $0x60] sm:$0xf]
      %v257 = vld [vmem:[%s1 + $0x64] sm:$0xf]
      %v258 = vld [vmem:[%s1 + $0x68] sm:$0xf]
      %v259 = vld [vmem:[%s1 + $0x6c] sm:$0xf]
      %v260 = vld [vmem:[%s1 + $0x70] sm:$0xf]
      %v261 = vld [vmem:[%s1 + $0x74] sm:$0xf]
      %v262 = vld [vmem:[%s1 + $0x78] sm:$0xf]
      %v263 = vld [vmem:[%s1 + $0x7c] sm:$0xf]
      %v264 = vld [vmem:[%s2] sm:$0xff]
      %v265 = vld [vmem:[%s2 + $0x8] sm:$0xff]
      %v266 = vld [vmem:[%s2 + $0x10] sm:$0xff]
      %v267 = vld [vmem:[%s2 + $0x18] sm:$0xff]
      %v268 = vld [vmem:[%s2 + $0x20] sm:$0xff]
      %v269 = vld [vmem:[%s2 + $0x28] sm:$0xff]
      %v270 = vld [vmem:[%s2 + $0x30] sm:$0xff]
      %v271 = vld [vmem:[%s2 + $0x38] sm:$0xff]
      %v272 = vld [vmem:[%s2 + $0x40] sm:$0xff]
      %v273 = vld [vmem:[%s2 + $0x48] sm:$0xff]
      %v274 = vld [vmem:[%s2 + $0x50] sm:$0xff]
      %v275 = vld [vmem:[%s2 + $0x58] sm:$0xff]
      %v276 = vld [vmem:[%s2 + $0x60] sm:$0xff]
      %v277 = vld [vmem:[%s2 + $0x68] sm:$0xff]
      %v278 = vld [vmem:[%s2 + $0x70] sm:$0xff]
      %v279 = vld [vmem:[%s2 + $0x78] sm:$0xff]
      %v280 = vld [vmem:[%s2 + $0x80] sm:$0xff]
      %v281 = vld [vmem:[%s2 + $0x88] sm:$0xff]
      %v282 = vld [vmem:[%s2 + $0x90] sm:$0xff]
      %v283 = vld [vmem:[%s2 + $0x98] sm:$0xff]
      %v284 = vld [vmem:[%s2 + $0xa0] sm:$0xff]
      %v285 = vld [vmem:[%s2 + $0xa8] sm:$0xff]
      %v286 = vld [vmem:[%s2 + $0xb0] sm:$0xff]
      %v287 = vld [vmem:[%s2 + $0xb8] sm:$0xff]
      %v288 = vld [vmem:[%s2 + $0xc0] sm:$0xff]
      %v289 = vld [vmem:[%s2 + $0xc8] sm:$0xff]
      %v290 = vld [vmem:[%s2 + $0xd0] sm:$0xff]
      %v291 = vld [vmem:[%s2 + $0xd8] sm:$0xff]
      %v292 = vld [vmem:[%s2 + $0xe0] sm:$0xff]
      %v293 = vld [vmem:[%s2 + $0xe8] sm:$0xff]
      %v294 = vld [vmem:[%s2 + $0xf0] sm:$0xff]
      %v295 = vld [vmem:[%s2 + $0xf8] sm:$0xff]
      %297 = vset.pattern.permute.xlu0 0
      %298 = vperm.xlu0 %297, %v264
      %v299 = vpop.permute.xlu0 %298
      %302 = vset.pattern.permute.xlu0 0
      %303 = vperm.xlu0 %302, %v265
      %v304 = vpop.permute.xlu0 %303
      %307 = vset.pattern.permute.xlu0 0
      %308 = vperm.xlu0 %307, %v266
      %v309 = vpop.permute.xlu0 %308
      %312 = vset.pattern.permute.xlu0 0
      %313 = vperm.xlu0 %312, %v267
      %v314 = vpop.permute.xlu0 %313
      %317 = vset.pattern.permute.xlu0 0
      %318 = vperm.xlu0 %317, %v268
      %v319 = vpop.permute.xlu0 %318
      %322 = vset.pattern.permute.xlu0 0
      %323 = vperm.xlu0 %322, %v269
      %v324 = vpop.permute.xlu0 %323
      %327 = vset.pattern.permute.xlu0 0
      %328 = vperm.xlu0 %327, %v270
      %v329 = vpop.permute.xlu0 %328
      %332 = vset.pattern.permute.xlu0 0
      %333 = vperm.xlu0 %332, %v271
      %v334 = vpop.permute.xlu0 %333
      %337 = vset.pattern.permute.xlu0 0
      %338 = vperm.xlu0 %337, %v272
      %v339 = vpop.permute.xlu0 %338
      %342 = vset.pattern.permute.xlu0 0
      %343 = vperm.xlu0 %342, %v273
      %v344 = vpop.permute.xlu0 %343
      %347 = vset.pattern.permute.xlu0 0
      %348 = vperm.xlu0 %347, %v274
      %v349 = vpop.permute.xlu0 %348
      %352 = vset.pattern.permute.xlu0 0
      %353 = vperm.xlu0 %352, %v275
      %v354 = vpop.permute.xlu0 %353
      %357 = vset.pattern.permute.xlu0 0
      %358 = vperm.xlu0 %357, %v276
      %v359 = vpop.permute.xlu0 %358
      %362 = vset.pattern.permute.xlu0 0
      %363 = vperm.xlu0 %362, %v277
      %v364 = vpop.permute.xlu0 %363
      %367 = vset.pattern.permute.xlu0 0
      %368 = vperm.xlu0 %367, %v278
      %v369 = vpop.permute.xlu0 %368
      %372 = vset.pattern.permute.xlu0 0
      %373 = vperm.xlu0 %372, %v279
      %v374 = vpop.permute.xlu0 %373
      %377 = vset.pattern.permute.xlu0 0
      %378 = vperm.xlu0 %377, %v280
      %v379 = vpop.permute.xlu0 %378
      %382 = vset.pattern.permute.xlu0 0
      %383 = vperm.xlu0 %382, %v281
      %v384 = vpop.permute.xlu0 %383
      %387 = vset.pattern.permute.xlu0 0
      %388 = vperm.xlu0 %387, %v282
      %v389 = vpop.permute.xlu0 %388
      %392 = vset.pattern.permute.xlu0 0
      %393 = vperm.xlu0 %392, %v283
      %v394 = vpop.permute.xlu0 %393
      %397 = vset.pattern.permute.xlu0 0
      %398 = vperm.xlu0 %397, %v284
      %v399 = vpop.permute.xlu0 %398
      %402 = vset.pattern.permute.xlu0 0
      %403 = vperm.xlu0 %402, %v285
      %v404 = vpop.permute.xlu0 %403
      %407 = vset.pattern.permute.xlu0 0
      %408 = vperm.xlu0 %407, %v286
      %v409 = vpop.permute.xlu0 %408
      %412 = vset.pattern.permute.xlu0 0
      %413 = vperm.xlu0 %412, %v287
      %v414 = vpop.permute.xlu0 %413
      %417 = vset.pattern.permute.xlu0 0
      %418 = vperm.xlu0 %417, %v288
      %v419 = vpop.permute.xlu0 %418
      %422 = vset.pattern.permute.xlu0 0
      %423 = vperm.xlu0 %422, %v289
      %v424 = vpop.permute.xlu0 %423
      %427 = vset.pattern.permute.xlu0 0
      %428 = vperm.xlu0 %427, %v290
      %v429 = vpop.permute.xlu0 %428
      %432 = vset.pattern.permute.xlu0 0
      %433 = vperm.xlu0 %432, %v291
      %v434 = vpop.permute.xlu0 %433
      %437 = vset.pattern.permute.xlu0 0
      %438 = vperm.xlu0 %437, %v292
      %v439 = vpop.permute.xlu0 %438
      %442 = vset.pattern.permute.xlu0 0
      %443 = vperm.xlu0 %442, %v293
      %v444 = vpop.permute.xlu0 %443
      %447 = vset.pattern.permute.xlu0 0
      %448 = vperm.xlu0 %447, %v294
      %v449 = vpop.permute.xlu0 %448
      %452 = vset.pattern.permute.xlu0 0
      %453 = vperm.xlu0 %452, %v295
      %v454 = vpop.permute.xlu0 %453
      %v488 = vunpack.c.l.b16 %v232
      %v489 = vunpack.c.l.b16 %v233
      %v490 = vunpack.c.l.b16 %v234
      %v491 = vunpack.c.l.b16 %v235
      %v492 = vunpack.c.l.b16 %v236
      %v493 = vunpack.c.l.b16 %v237
      %v494 = vunpack.c.l.b16 %v238
      %v495 = vunpack.c.l.b16 %v239
      %v496 = vunpack.c.l.b16 %v240
      %v497 = vunpack.c.l.b16 %v241
      %v498 = vunpack.c.l.b16 %v242
      %v499 = vunpack.c.l.b16 %v243
      %v500 = vunpack.c.l.b16 %v244
      %v501 = vunpack.c.l.b16 %v245
      %v502 = vunpack.c.l.b16 %v246
      %v503 = vunpack.c.l.b16 %v247
      %v504 = vunpack.c.l.b16 %v248
      %v505 = vunpack.c.l.b16 %v249
      %v506 = vunpack.c.l.b16 %v250
      %v507 = vunpack.c.l.b16 %v251
      %v508 = vunpack.c.l.b16 %v252
      %v509 = vunpack.c.l.b16 %v253
      %v510 = vunpack.c.l.b16 %v254
      %v511 = vunpack.c.l.b16 %v255
      %v512 = vunpack.c.l.b16 %v256
      %v513 = vunpack.c.l.b16 %v257
      %v514 = vunpack.c.l.b16 %v258
      %v515 = vunpack.c.l.b16 %v259
      %v516 = vunpack.c.l.b16 %v260
      %v517 = vunpack.c.l.b16 %v261
      %v518 = vunpack.c.l.b16 %v262
      %v519 = vunpack.c.l.b16 %v263
      %v520 = vpack.c.b16 %v489, %v488
      %v521 = vpack.c.b16 %v491, %v490
      %v522 = vpack.c.b16 %v493, %v492
      %v523 = vpack.c.b16 %v495, %v494
      %v524 = vpack.c.b16 %v497, %v496
      %v525 = vpack.c.b16 %v499, %v498
      %v526 = vpack.c.b16 %v501, %v500
      %v527 = vpack.c.b16 %v503, %v502
      %v528 = vpack.c.b16 %v505, %v504
      %v529 = vpack.c.b16 %v507, %v506
      %v530 = vpack.c.b16 %v509, %v508
      %v531 = vpack.c.b16 %v511, %v510
      %v532 = vpack.c.b16 %v513, %v512
      %v533 = vpack.c.b16 %v515, %v514
      %v534 = vpack.c.b16 %v517, %v516
      %v535 = vpack.c.b16 %v519, %v518
      %vm536 = vcmask 261120
      %v538 = vsel %vm536, %v520, 0
      %v541 = vsel %vm536, %v521, 0
      %v544 = vsel %vm536, %v522, 0
      %v547 = vsel %vm536, %v523, 0
      %v550 = vsel %vm536, %v524, 0
      %v553 = vsel %vm536, %v525, 0
      %v556 = vsel %vm536, %v526, 0
      %v559 = vsel %vm536, %v527, 0
      %v562 = vsel %vm536, %v528, 0
      %v565 = vsel %vm536, %v529, 0
      %v568 = vsel %vm536, %v530, 0
      %v571 = vsel %vm536, %v531, 0
      %v574 = vsel %vm536, %v532, 0
      %v577 = vsel %vm536, %v533, 0
      %v580 = vsel %vm536, %v534, 0
      %v583 = vsel %vm536, %v535, 0
      %585 = vmatprep.subr.bf16.mxu0 0
      %586 = vmatpush1.bf16.msra.mxu0 %v230
      %587 = vmatprep.subr.bf16.mxu0 0
      %588 = vmatpush1.bf16.msra.mxu0 %v231
      %589 = vmatprep.subr.bf16.mxu0 0
      %590 = vmatpush1.bf16.msra.mxu0 0
      %591 = vmatprep.subr.bf16.mxu0 0
      %592 = vmatpush1.bf16.msra.mxu0 0
      %593 = vmatprep.subr.bf16.mxu0 0
      %594 = vmatpush1.bf16.msra.mxu0 0
      %595 = vmatprep.subr.bf16.mxu0 0
      %596 = vmatpush1.bf16.msra.mxu0 0
      %597 = vmatprep.subr.bf16.mxu0 0
      %598 = vmatpush1.bf16.msra.mxu0 0
      %599 = vmatprep.subr.bf16.mxu0 0
      %600 = vmatpush1.bf16.msra.mxu0 0
      %601 = vmatprep.subr.bf16.mxu0 0
      %602 = vmatpush1.bf16.msra.mxu0 0
      %603 = vmatprep.subr.bf16.mxu0 0
      %604 = vmatpush1.bf16.msra.mxu0 0
      %605 = vmatprep.subr.bf16.mxu0 0
      %606 = vmatpush1.bf16.msra.mxu0 0
      %607 = vmatprep.subr.bf16.mxu0 0
      %608 = vmatpush1.bf16.msra.mxu0 0
      %609 = vmatprep.subr.bf16.mxu0 0
      %610 = vmatpush1.bf16.msra.mxu0 0
      %611 = vmatprep.subr.bf16.mxu0 0
      %612 = vmatpush1.bf16.msra.mxu0 0
      %613 = vmatprep.subr.bf16.mxu0 0
      %614 = vmatpush1.bf16.msra.mxu0 0
      %615 = vmatprep.subr.bf16.mxu0 0
      %616 = vmatpush1.bf16.msra.mxu0 0
      %617 = vmatprep.mubr.bf16.mxu0 0
      %618 = vmatmul.mubr.bf16.gmra.mrb[0].mxu0 %v538
      %v619 = vpop.f32.mrb[0].mxu0
      %v620 = vadd.f32 %v299, %v619
      %v621 = vpop.f32.mrb[0].mxu0
      %v622 = vpop.f32.mrb[0].mxu0
      %v623 = vadd.f32 %v304, %v622
      %v624 = vpop.f32.mrb[0].mxu0
      %625 = vmatprep.mubr.bf16.mxu0 0
      %626 = vmatmul.mubr.bf16.gmra.mrb[0].mxu0 %v541
      %v627 = vpop.f32.mrb[0].mxu0
      %v628 = vadd.f32 %v309, %v627
      %v629 = vpop.f32.mrb[0].mxu0
      %v630 = vpop.f32.mrb[0].mxu0
      %v631 = vadd.f32 %v314, %v630
      %v632 = vpop.f32.mrb[0].mxu0
      %633 = vmatprep.mubr.bf16.mxu0 0
      %634 = vmatmul.mubr.bf16.gmra.mrb[0].mxu0 %v544
      %v635 = vpop.f32.mrb[0].mxu0
      %v636 = vadd.f32 %v319, %v635
      %v637 = vpop.f32.mrb[0].mxu0
      %v638 = vpop.f32.mrb[0].mxu0
      %v639 = vadd.f32 %v324, %v638
      %v640 = vpop.f32.mrb[0].mxu0
      %641 = vmatprep.mubr.bf16.mxu0 0
      %642 = vmatmul.mubr.bf16.gmra.mrb[0].mxu0 %v547
      %v643 = vpop.f32.mrb[0].mxu0
      %v644 = vadd.f32 %v329, %v643
      %v645 = vpop.f32.mrb[0].mxu0
      %v646 = vpop.f32.mrb[0].mxu0
      %v647 = vadd.f32 %v334, %v646
      %v648 = vpop.f32.mrb[0].mxu0
      %649 = vmatprep.mubr.bf16.mxu0 0
      %650 = vmatmul.mubr.bf16.gmra.mrb[0].mxu0 %v550
      %v651 = vpop.f32.mrb[0].mxu0
      %v652 = vadd.f32 %v339, %v651
      %v653 = vpop.f32.mrb[0].mxu0
      %v654 = vpop.f32.mrb[0].mxu0
      %v655 = vadd.f32 %v344, %v654
      %v656 = vpop.f32.mrb[0].mxu0
      %657 = vmatprep.mubr.bf16.mxu0 0
      %658 = vmatmul.mubr.bf16.gmra.mrb[0].mxu0 %v553
      %v659 = vpop.f32.mrb[0].mxu0
      %v660 = vadd.f32 %v349, %v659
      %v661 = vpop.f32.mrb[0].mxu0
      %v662 = vpop.f32.mrb[0].mxu0
      %v663 = vadd.f32 %v354, %v662
      %v664 = vpop.f32.mrb[0].mxu0
      %665 = vmatprep.mubr.bf16.mxu0 0
      %666 = vmatmul.mubr.bf16.gmra.mrb[0].mxu0 %v556
      %v667 = vpop.f32.mrb[0].mxu0
      %v668 = vadd.f32 %v359, %v667
      %v669 = vpop.f32.mrb[0].mxu0
      %v670 = vpop.f32.mrb[0].mxu0
      %v671 = vadd.f32 %v364, %v670
      %v672 = vpop.f32.mrb[0].mxu0
      %673 = vmatprep.mubr.bf16.mxu0 0
      %674 = vmatmul.mubr.bf16.gmra.mrb[0].mxu0 %v559
      %v675 = vpop.f32.mrb[0].mxu0
      %v676 = vadd.f32 %v369, %v675
      %v677 = vpop.f32.mrb[0].mxu0
      %v678 = vpop.f32.mrb[0].mxu0
      %v679 = vadd.f32 %v374, %v678
      %v680 = vpop.f32.mrb[0].mxu0
      %681 = vmatprep.mubr.bf16.mxu0 0
      %682 = vmatmul.mubr.bf16.gmra.mrb[0].mxu0 %v562
      %v683 = vpop.f32.mrb[0].mxu0
      %v684 = vadd.f32 %v379, %v683
      %v685 = vpop.f32.mrb[0].mxu0
      %v686 = vpop.f32.mrb[0].mxu0
      %v687 = vadd.f32 %v384, %v686
      %v688 = vpop.f32.mrb[0].mxu0
      %689 = vmatprep.mubr.bf16.mxu0 0
      %690 = vmatmul.mubr.bf16.gmra.mrb[0].mxu0 %v565
      %v691 = vpop.f32.mrb[0].mxu0
      %v692 = vadd.f32 %v389, %v691
      %v693 = vpop.f32.mrb[0].mxu0
      %v694 = vpop.f32.mrb[0].mxu0
      %v695 = vadd.f32 %v394, %v694
      %v696 = vpop.f32.mrb[0].mxu0
      %697 = vmatprep.mubr.bf16.mxu0 0
      %698 = vmatmul.mubr.bf16.gmra.mrb[0].mxu0 %v568
      %v699 = vpop.f32.mrb[0].mxu0
      %v700 = vadd.f32 %v399, %v699
      %v701 = vpop.f32.mrb[0].mxu0
      %v702 = vpop.f32.mrb[0].mxu0
      %v703 = vadd.f32 %v404, %v702
      %v704 = vpop.f32.mrb[0].mxu0
      %705 = vmatprep.mubr.bf16.mxu0 0
      %706 = vmatmul.mubr.bf16.gmra.mrb[0].mxu0 %v571
      %v707 = vpop.f32.mrb[0].mxu0
      %v708 = vadd.f32 %v409, %v707
      %v709 = vpop.f32.mrb[0].mxu0
      %v710 = vpop.f32.mrb[0].mxu0
      %v711 = vadd.f32 %v414, %v710
      %v712 = vpop.f32.mrb[0].mxu0
      %713 = vmatprep.mubr.bf16.mxu0 0
      %714 = vmatmul.mubr.bf16.gmra.mrb[0].mxu0 %v574
      %v715 = vpop.f32.mrb[0].mxu0
      %v716 = vadd.f32 %v419, %v715
      %v717 = vpop.f32.mrb[0].mxu0
      %v718 = vpop.f32.mrb[0].mxu0
      %v719 = vadd.f32 %v424, %v718
      %v720 = vpop.f32.mrb[0].mxu0
      %721 = vmatprep.mubr.bf16.mxu0 0
      %722 = vmatmul.mubr.bf16.gmra.mrb[0].mxu0 %v577
      %v723 = vpop.f32.mrb[0].mxu0
      %v724 = vadd.f32 %v429, %v723
      %v725 = vpop.f32.mrb[0].mxu0
      %v726 = vpop.f32.mrb[0].mxu0
      %v727 = vadd.f32 %v434, %v726
      %v728 = vpop.f32.mrb[0].mxu0
      %729 = vmatprep.mubr.bf16.mxu0 0
      %730 = vmatmul.mubr.bf16.gmra.mrb[0].mxu0 %v580
      %v731 = vpop.f32.mrb[0].mxu0
      %v732 = vadd.f32 %v439, %v731
      %v733 = vpop.f32.mrb[0].mxu0
      %v734 = vpop.f32.mrb[0].mxu0
      %v735 = vadd.f32 %v444, %v734
      %v736 = vpop.f32.mrb[0].mxu0
      %737 = vmatprep.mubr.bf16.mxu0 0
      %738 = vmatmul.mubr.bf16.gmra.mrb[0].mxu0 %v583
      %v739 = vpop.f32.mrb[0].mxu0
      %v740 = vadd.f32 %v449, %v739
      %v741 = vpop.f32.mrb[0].mxu0
      %v742 = vpop.f32.mrb[0].mxu0
      %v743 = vadd.f32 %v454, %v742
      %v744 = vpop.f32.mrb[0].mxu0
      %745 = vdwg.mxu0
      %746 = vxpose.xlu0.b32.start [1/16] %v620, 128
      %747 = vxpose.xlu0.b32.cont [2/16] %v623, 128
      %748 = vxpose.xlu0.b32.cont [3/16] %v628, 128
      %749 = vxpose.xlu0.b32.cont [4/16] %v631, 128
      %750 = vxpose.xlu0.b32.cont [5/16] %v636, 128
      %751 = vxpose.xlu0.b32.cont [6/16] %v639, 128
      %752 = vxpose.xlu0.b32.cont [7/16] %v644, 128
      %753 = vxpose.xlu0.b32.cont [8/16] %v647, 128
      %754 = vxpose.xlu0.b32.cont [9/16] 0.0, 128
      %755 = vxpose.xlu0.b32.cont [10/16] 0.0, 128
      %756 = vxpose.xlu0.b32.cont [11/16] 0.0, 128
      %757 = vxpose.xlu0.b32.cont [12/16] 0.0, 128
      %758 = vxpose.xlu0.b32.cont [13/16] 0.0, 128
      %759 = vxpose.xlu0.b32.cont [14/16] 0.0, 128
      %760 = vxpose.xlu0.b32.cont [15/16] 0.0, 128
      %761 = vxpose.xlu0.b32.end [16/16] 0.0, 128
      %v762 = vpop.trf.xlu0
      %v763 = vpop.trf.xlu0
      %v764 = vpop.trf.xlu0
      %v765 = vpop.trf.xlu0
      %v766 = vpop.trf.xlu0
      %v767 = vpop.trf.xlu0
      %v768 = vpop.trf.xlu0
      %v769 = vpop.trf.xlu0
      %v770 = vpop.trf.xlu0
      %v771 = vpop.trf.xlu0
      %v772 = vpop.trf.xlu0
      %v773 = vpop.trf.xlu0
      %v774 = vpop.trf.xlu0
      %v775 = vpop.trf.xlu0
      %v776 = vpop.trf.xlu0
      %v777 = vpop.trf.xlu0
      %vm778 = vcmask 130048
      %v780 = vsel %vm778, %v762, 0
      %v783 = vsel %vm778, %v763, 0
      %v786 = vsel %vm778, %v764, 0
      %v789 = vsel %vm778, %v765, 0
      %v792 = vsel %vm778, %v766, 0
      %v795 = vsel %vm778, %v767, 0
      %v798 = vsel %vm778, %v768, 0
      %v801 = vsel %vm778, %v769, 0
      %803 = vmatprep.subr.mxu0 0.0
      %804 = vmatpush1.msra.mxu0 %v652
      %805 = vmatprep.subr.mxu0 0.0
      %806 = vmatpush1.msra.mxu0 %v655
      %807 = vmatprep.subr.mxu0 0.0
      %808 = vmatpush1.msra.mxu0 0.0
      %809 = vmatprep.subr.mxu0 0.0
      %810 = vmatpush1.msra.mxu0 0.0
      %811 = vmatprep.subr.mxu0 0.0
      %812 = vmatpush1.msra.mxu0 0.0
      %813 = vmatprep.subr.mxu0 0.0
      %814 = vmatpush1.msra.mxu0 0.0
      %815 = vmatprep.subr.mxu0 0.0
      %816 = vmatpush1.msra.mxu0 0.0
      %817 = vmatprep.subr.mxu0 0.0
      %818 = vmatpush1.msra.mxu0 0.0
      %819 = vmatprep.subr.mxu0 0.0
      %820 = vmatpush1.msra.mxu0 0.0
      %821 = vmatprep.subr.mxu0 0.0
      %822 = vmatpush1.msra.mxu0 0.0
      %823 = vmatprep.subr.mxu0 0.0
      %824 = vmatpush1.msra.mxu0 0.0
      %825 = vmatprep.subr.mxu0 0.0
      %826 = vmatpush1.msra.mxu0 0.0
      %827 = vmatprep.subr.mxu0 0.0
      %828 = vmatpush1.msra.mxu0 0.0
      %829 = vmatprep.subr.mxu0 0.0
      %830 = vmatpush1.msra.mxu0 0.0
      %831 = vmatprep.subr.mxu0 0.0
      %832 = vmatpush1.msra.mxu0 0.0
      %833 = vmatprep.subr.mxu0 0.0
      %834 = vmatpush1.msra.mxu0 0.0
      %835 = vmatprep.subr.mxu0 0.0
      %836 = vmatpush1.msra.mxu0 0.0
      %837 = vmatprep.subr.mxu0 0.0
      %838 = vmatpush1.msra.mxu0 0.0
      %839 = vmatprep.subr.mxu0 0.0
      %840 = vmatpush1.msra.mxu0 0.0
      %841 = vmatprep.subr.mxu0 0.0
      %842 = vmatpush1.msra.mxu0 0.0
      %843 = vmatprep.subr.mxu0 0.0
      %844 = vmatpush1.msra.mxu0 0.0
      %845 = vmatprep.subr.mxu0 0.0
      %846 = vmatpush1.msra.mxu0 0.0
      %847 = vmatprep.subr.mxu0 0.0
      %848 = vmatpush1.msra.mxu0 0.0
      %849 = vmatprep.subr.mxu0 0.0
      %850 = vmatpush1.msra.mxu0 0.0
      %851 = vmatprep.subr.mxu0 0.0
      %852 = vmatpush1.msra.mxu0 0.0
      %853 = vmatprep.subr.mxu0 0.0
      %854 = vmatpush1.msra.mxu0 0.0
      %855 = vmatprep.subr.mxu0 0.0
      %856 = vmatpush1.msra.mxu0 0.0
      %857 = vmatprep.subr.mxu0 0.0
      %858 = vmatpush1.msra.mxu0 0.0
      %859 = vmatprep.subr.mxu0 0.0
      %860 = vmatpush1.msra.mxu0 0.0
      %861 = vmatprep.subr.mxu0 0.0
      %862 = vmatpush1.msra.mxu0 0.0
      %863 = vmatprep.subr.mxu0 0.0
      %864 = vmatpush1.msra.mxu0 0.0
      %865 = vmatprep.subr.mxu0 0.0
      %866 = vmatpush1.msra.mxu0 0.0
      %867 = vmatprep.mubr.f32.mxu0 0.0
      %868 = vmatmul.mubr.f32.gmra.mrb[0].mxu0 %v780
      %v869 = vpop.f32.mrb[0].mxu0
      %v870 = vadd.f32 0.0, %v869
      %v871 = vpop.f32.mrb[0].mxu0
      %872 = vmatprep.mubr.f32.mxu0 0.0
      %873 = vmatmul.mubr.f32.gmra.mrb[0].mxu0 %v783
      %v874 = vpop.f32.mrb[0].mxu0
      %v875 = vadd.f32 0.0, %v874
      %v876 = vpop.f32.mrb[0].mxu0
      %877 = vmatprep.mubr.f32.mxu0 0.0
      %878 = vmatmul.mubr.f32.gmra.mrb[0].mxu0 %v786
      %v879 = vpop.f32.mrb[0].mxu0
      %v880 = vadd.f32 0.0, %v879
      %v881 = vpop.f32.mrb[0].mxu0
      %882 = vmatprep.mubr.f32.mxu0 0.0
      %883 = vmatmul.mubr.f32.gmra.mrb[0].mxu0 %v789
      %v884 = vpop.f32.mrb[0].mxu0
      %v885 = vadd.f32 0.0, %v884
      %v886 = vpop.f32.mrb[0].mxu0
      %887 = vmatprep.mubr.f32.mxu0 0.0
      %888 = vmatmul.mubr.f32.gmra.mrb[0].mxu0 %v792
      %v889 = vpop.f32.mrb[0].mxu0
      %v890 = vadd.f32 0.0, %v889
      %v891 = vpop.f32.mrb[0].mxu0
      %892 = vmatprep.mubr.f32.mxu0 0.0
      %893 = vmatmul.mubr.f32.gmra.mrb[0].mxu0 %v795
      %v894 = vpop.f32.mrb[0].mxu0
      %v895 = vadd.f32 0.0, %v894
      %v896 = vpop.f32.mrb[0].mxu0
      %897 = vmatprep.mubr.f32.mxu0 0.0
      %898 = vmatmul.mubr.f32.gmra.mrb[0].mxu0 %v798
      %v899 = vpop.f32.mrb[0].mxu0
      %v900 = vadd.f32 0.0, %v899
      %v901 = vpop.f32.mrb[0].mxu0
      %902 = vmatprep.mubr.f32.mxu0 0.0
      %903 = vmatmul.mubr.f32.gmra.mrb[0].mxu0 %v801
      %v904 = vpop.f32.mrb[0].mxu0
      %v905 = vadd.f32 0.0, %v904
      %v906 = vpop.f32.mrb[0].mxu0
      %907 = vdwg.mxu0
      %vm908 = vcmask 523264
      %v909 = vsel %vm908, %v870, -inf
      %910 = vmax.xlane.f32.xlu0 %v909
      %v911 = vpop.xlane.xlu0 %910
      %v912 = vsel %vm908, %v875, -inf
      %913 = vmax.xlane.f32.xlu0 %v912
      %v914 = vpop.xlane.xlu0 %913
      %v915 = vsel %vm908, %v880, -inf
      %916 = vmax.xlane.f32.xlu0 %v915
      %v917 = vpop.xlane.xlu0 %916
      %v918 = vsel %vm908, %v885, -inf
      %919 = vmax.xlane.f32.xlu0 %v918
      %v920 = vpop.xlane.xlu0 %919
      %v921 = vsel %vm908, %v890, -inf
      %922 = vmax.xlane.f32.xlu0 %v921
      %v923 = vpop.xlane.xlu0 %922
      %v924 = vsel %vm908, %v895, -inf
      %925 = vmax.xlane.f32.xlu0 %v924
      %v926 = vpop.xlane.xlu0 %925
      %v927 = vsel %vm908, %v900, -inf
      %928 = vmax.xlane.f32.xlu0 %v927
      %v929 = vpop.xlane.xlu0 %928
      %v930 = vsel %vm908, %v905, -inf
      %931 = vmax.xlane.f32.xlu0 %v930
      %v932 = vpop.xlane.xlu0 %931
      %v933 = vsub.f32 %v870, %v911
      %v934 = vsub.f32 %v875, %v914
      %v935 = vsub.f32 %v880, %v917
      %v936 = vsub.f32 %v885, %v920
      %v937 = vsub.f32 %v890, %v923
      %v938 = vsub.f32 %v895, %v926
      %v939 = vsub.f32 %v900, %v929
      %v940 = vsub.f32 %v905, %v932
      %v941 = vmul.f32 %v933, 1.442695
      %v942 = vpow.pop %v941
      %v943 = vmul.f32 %v934, 1.442695
      %v944 = vpow.pop %v943
      %v945 = vmul.f32 %v935, 1.442695
      %v946 = vpow.pop %v945
      %v947 = vmul.f32 %v936, 1.442695
      %v948 = vpow.pop %v947
      %v949 = vmul.f32 %v937, 1.442695
      %v950 = vpow.pop %v949
      %v951 = vmul.f32 %v938, 1.442695
      %v952 = vpow.pop %v951
      %v953 = vmul.f32 %v939, 1.442695
      %v954 = vpow.pop %v953
      %v955 = vmul.f32 %v940, 1.442695
      %v956 = vpow.pop %v955
      %v957 = vsel %vm908, %v942, 0.0
      %958 = vadd.xlane.f32.xlu0 %v957
      %v959 = vpop.xlane.xlu0 %958
      %v960 = vsel %vm908, %v944, 0.0
      %961 = vadd.xlane.f32.xlu0 %v960
      %v962 = vpop.xlane.xlu0 %961
      %v963 = vsel %vm908, %v946, 0.0
      %964 = vadd.xlane.f32.xlu0 %v963
      %v965 = vpop.xlane.xlu0 %964
      %v966 = vsel %vm908, %v948, 0.0
      %967 = vadd.xlane.f32.xlu0 %v966
      %v968 = vpop.xlane.xlu0 %967
      %v969 = vsel %vm908, %v950, 0.0
      %970 = vadd.xlane.f32.xlu0 %v969
      %v971 = vpop.xlane.xlu0 %970
      %v972 = vsel %vm908, %v952, 0.0
      %973 = vadd.xlane.f32.xlu0 %v972
      %v974 = vpop.xlane.xlu0 %973
      %v975 = vsel %vm908, %v954, 0.0
      %976 = vadd.xlane.f32.xlu0 %v975
      %v977 = vpop.xlane.xlu0 %976
      %v978 = vsel %vm908, %v956, 0.0
      %979 = vadd.xlane.f32.xlu0 %v978
      %v980 = vpop.xlane.xlu0 %979
      %v981 = vrcp.pop %v959
      %v982 = vrcp.pop %v962
      %v983 = vrcp.pop %v965
      %v984 = vrcp.pop %v968
      %v985 = vrcp.pop %v971
      %v986 = vrcp.pop %v974
      %v987 = vrcp.pop %v977
      %v988 = vrcp.pop %v980
      %v989 = vmul.f32 %v942, %v981
      %v990 = vmul.f32 %v944, %v982
      %v991 = vmul.f32 %v946, %v983
      %v992 = vmul.f32 %v948, %v984
      %v993 = vmul.f32 %v950, %v985
      %v994 = vmul.f32 %v952, %v986
      %v995 = vmul.f32 %v954, %v987
      %v996 = vmul.f32 %v956, %v988
      %v998 = vsel %vm908, %v684, 0
      %v1001 = vsel %vm908, %v687, 0
      %v1004 = vsel %vm908, %v692, 0
      %v1007 = vsel %vm908, %v695, 0
      %v1010 = vsel %vm908, %v989, 0
      %v1013 = vsel %vm908, %v990, 0
      %v1016 = vsel %vm908, %v991, 0
      %v1019 = vsel %vm908, %v992, 0
      %v1022 = vsel %vm908, %v993, 0
      %v1025 = vsel %vm908, %v994, 0
      %v1028 = vsel %vm908, %v995, 0
      %v1031 = vsel %vm908, %v996, 0
      %1033 = vmatprep.subr.mxu0 0.0
      %1034 = vmatpush1.xpose.msra.mxu0 %v1010
      %1035 = vmatprep.subr.mxu0 0.0
      %1036 = vmatpush1.xpose.msra.mxu0 %v1013
      %1037 = vmatprep.subr.mxu0 0.0
      %1038 = vmatpush1.xpose.msra.mxu0 %v1016
      %1039 = vmatprep.subr.mxu0 0.0
      %1040 = vmatpush1.xpose.msra.mxu0 %v1019
      %1041 = vmatprep.subr.mxu0 0.0
      %1042 = vmatpush1.xpose.msra.mxu0 %v1022
      %1043 = vmatprep.subr.mxu0 0.0
      %1044 = vmatpush1.xpose.msra.mxu0 %v1025
      %1045 = vmatprep.subr.mxu0 0.0
      %1046 = vmatpush1.xpose.msra.mxu0 %v1028
      %1047 = vmatprep.subr.mxu0 0.0
      %1048 = vmatpush1.xpose.msra.mxu0 %v1031
      %1049 = vmatprep.subr.mxu0 0.0
      %1050 = vmatpush1.xpose.msra.mxu0 0.0
      %1051 = vmatprep.subr.mxu0 0.0
      %1052 = vmatpush1.xpose.msra.mxu0 0.0
      %1053 = vmatprep.subr.mxu0 0.0
      %1054 = vmatpush1.xpose.msra.mxu0 0.0
      %1055 = vmatprep.subr.mxu0 0.0
      %1056 = vmatpush1.xpose.msra.mxu0 0.0
      %1057 = vmatprep.subr.mxu0 0.0
      %1058 = vmatpush1.xpose.msra.mxu0 0.0
      %1059 = vmatprep.subr.mxu0 0.0
      %1060 = vmatpush1.xpose.msra.mxu0 0.0
      %1061 = vmatprep.subr.mxu0 0.0
      %1062 = vmatpush1.xpose.msra.mxu0 0.0
      %1063 = vmatprep.subr.mxu0 0.0
      %1064 = vmatpush1.xpose.msra.mxu0 0.0
      %1065 = vmatprep.subr.mxu0 0.0
      %1066 = vmatpush1.xpose.msra.mxu0 0.0
      %1067 = vmatprep.subr.mxu0 0.0
      %1068 = vmatpush1.xpose.msra.mxu0 0.0
      %1069 = vmatprep.subr.mxu0 0.0
      %1070 = vmatpush1.xpose.msra.mxu0 0.0
      %1071 = vmatprep.subr.mxu0 0.0
      %1072 = vmatpush1.xpose.msra.mxu0 0.0
      %1073 = vmatprep.subr.mxu0 0.0
      %1074 = vmatpush1.xpose.msra.mxu0 0.0
      %1075 = vmatprep.subr.mxu0 0.0
      %1076 = vmatpush1.xpose.msra.mxu0 0.0
      %1077 = vmatprep.subr.mxu0 0.0
      %1078 = vmatpush1.xpose.msra.mxu0 0.0
      %1079 = vmatprep.subr.mxu0 0.0
      %1080 = vmatpush1.xpose.msra.mxu0 0.0
      %1081 = vmatprep.subr.mxu0 0.0
      %1082 = vmatpush1.xpose.msra.mxu0 0.0
      %1083 = vmatprep.subr.mxu0 0.0
      %1084 = vmatpush1.xpose.msra.mxu0 0.0
      %1085 = vmatprep.subr.mxu0 0.0
      %1086 = vmatpush1.xpose.msra.mxu0 0.0
      %1087 = vmatprep.subr.mxu0 0.0
      %1088 = vmatpush1.xpose.msra.mxu0 0.0
      %1089 = vmatprep.subr.mxu0 0.0
      %1090 = vmatpush1.xpose.msra.mxu0 0.0
      %1091 = vmatprep.subr.mxu0 0.0
      %1092 = vmatpush1.xpose.msra.mxu0 0.0
      %1093 = vmatprep.subr.mxu0 0.0
      %1094 = vmatpush1.xpose.msra.mxu0 0.0
      %1095 = vmatprep.subr.mxu0 0.0
      %1096 = vmatpush1.xpose.msra.mxu0 0.0
      %1097 = vmatprep.mubr.f32.mxu0 0.0
      %1098 = vmatmul.mubr.f32.gmra.mrb[0].mxu0 %v998
      %v1099 = vpop.f32.mrb[0].mxu0
      %v1100 = vadd.f32 0.0, %v1099
      %v1101 = vpop.f32.mrb[0].mxu0
      %1102 = vmatprep.mubr.f32.mxu0 0.0
      %1103 = vmatmul.mubr.f32.gmra.mrb[0].mxu0 %v1001
      %v1104 = vpop.f32.mrb[0].mxu0
      %v1105 = vadd.f32 0.0, %v1104
      %v1106 = vpop.f32.mrb[0].mxu0
      %1107 = vmatprep.mubr.f32.mxu0 0.0
      %1108 = vmatmul.mubr.f32.gmra.mrb[0].mxu0 %v1004
      %v1109 = vpop.f32.mrb[0].mxu0
      %v1110 = vadd.f32 0.0, %v1109
      %v1111 = vpop.f32.mrb[0].mxu0
      %1112 = vmatprep.mubr.f32.mxu0 0.0
      %1113 = vmatmul.mubr.f32.gmra.mrb[0].mxu0 %v1007
      %v1114 = vpop.f32.mrb[0].mxu0
      %v1115 = vadd.f32 0.0, %v1114
      %v1116 = vpop.f32.mrb[0].mxu0
      %1117 = vdwg.mxu0
      %1118 = vrot.lane.b32.xlu0 %v762, 112
      %v1119 = vpop.permute.xlu0 %1118
      %1120 = vrot.lane.b32.xlu0 %v763, 112
      %v1121 = vpop.permute.xlu0 %1120
      %1122 = vrot.lane.b32.xlu0 %v764, 112
      %v1123 = vpop.permute.xlu0 %1122
      %1124 = vrot.lane.b32.xlu0 %v765, 112
      %v1125 = vpop.permute.xlu0 %1124
      %1126 = vrot.lane.b32.xlu0 %v766, 112
      %v1127 = vpop.permute.xlu0 %1126
      %1128 = vrot.lane.b32.xlu0 %v767, 112
      %v1129 = vpop.permute.xlu0 %1128
      %1130 = vrot.lane.b32.xlu0 %v768, 112
      %v1131 = vpop.permute.xlu0 %1130
      %1132 = vrot.lane.b32.xlu0 %v769, 112
      %v1133 = vpop.permute.xlu0 %1132
      %v1134 = vsel %vm778, %v1119, 0
      %v1136 = vsel %vm778, %v1121, 0
      %v1138 = vsel %vm778, %v1123, 0
      %v1140 = vsel %vm778, %v1125, 0
      %v1142 = vsel %vm778, %v1127, 0
      %v1144 = vsel %vm778, %v1129, 0
      %v1146 = vsel %vm778, %v1131, 0
      %v1148 = vsel %vm778, %v1133, 0
      %1150 = vmatprep.subr.mxu0 0.0
      %1151 = vmatpush1.msra.mxu0 %v660
      %1152 = vmatprep.subr.mxu0 0.0
      %1153 = vmatpush1.msra.mxu0 %v663
      %1154 = vmatprep.subr.mxu0 0.0
      %1155 = vmatpush1.msra.mxu0 0.0
      %1156 = vmatprep.subr.mxu0 0.0
      %1157 = vmatpush1.msra.mxu0 0.0
      %1158 = vmatprep.subr.mxu0 0.0
      %1159 = vmatpush1.msra.mxu0 0.0
      %1160 = vmatprep.subr.mxu0 0.0
      %1161 = vmatpush1.msra.mxu0 0.0
      %1162 = vmatprep.subr.mxu0 0.0
      %1163 = vmatpush1.msra.mxu0 0.0
      %1164 = vmatprep.subr.mxu0 0.0
      %1165 = vmatpush1.msra.mxu0 0.0
      %1166 = vmatprep.subr.mxu0 0.0
      %1167 = vmatpush1.msra.mxu0 0.0
      %1168 = vmatprep.subr.mxu0 0.0
      %1169 = vmatpush1.msra.mxu0 0.0
      %1170 = vmatprep.subr.mxu0 0.0
      %1171 = vmatpush1.msra.mxu0 0.0
      %1172 = vmatprep.subr.mxu0 0.0
      %1173 = vmatpush1.msra.mxu0 0.0
      %1174 = vmatprep.subr.mxu0 0.0
      %1175 = vmatpush1.msra.mxu0 0.0
      %1176 = vmatprep.subr.mxu0 0.0
      %1177 = vmatpush1.msra.mxu0 0.0
      %1178 = vmatprep.subr.mxu0 0.0
      %1179 = vmatpush1.msra.mxu0 0.0
      %1180 = vmatprep.subr.mxu0 0.0
      %1181 = vmatpush1.msra.mxu0 0.0
      %1182 = vmatprep.subr.mxu0 0.0
      %1183 = vmatpush1.msra.mxu0 0.0
      %1184 = vmatprep.subr.mxu0 0.0
      %1185 = vmatpush1.msra.mxu0 0.0
      %1186 = vmatprep.subr.mxu0 0.0
      %1187 = vmatpush1.msra.mxu0 0.0
      %1188 = vmatprep.subr.mxu0 0.0
      %1189 = vmatpush1.msra.mxu0 0.0
      %1190 = vmatprep.subr.mxu0 0.0
      %1191 = vmatpush1.msra.mxu0 0.0
      %1192 = vmatprep.subr.mxu0 0.0
      %1193 = vmatpush1.msra.mxu0 0.0
      %1194 = vmatprep.subr.mxu0 0.0
      %1195 = vmatpush1.msra.mxu0 0.0
      %1196 = vmatprep.subr.mxu0 0.0
      %1197 = vmatpush1.msra.mxu0 0.0
      %1198 = vmatprep.subr.mxu0 0.0
      %1199 = vmatpush1.msra.mxu0 0.0
      %1200 = vmatprep.subr.mxu0 0.0
      %1201 = vmatpush1.msra.mxu0 0.0
      %1202 = vmatprep.subr.mxu0 0.0
      %1203 = vmatpush1.msra.mxu0 0.0
      %1204 = vmatprep.subr.mxu0 0.0
      %1205 = vmatpush1.msra.mxu0 0.0
      %1206 = vmatprep.subr.mxu0 0.0
      %1207 = vmatpush1.msra.mxu0 0.0
      %1208 = vmatprep.subr.mxu0 0.0
      %1209 = vmatpush1.msra.mxu0 0.0
      %1210 = vmatprep.subr.mxu0 0.0
      %1211 = vmatpush1.msra.mxu0 0.0
      %1212 = vmatprep.subr.mxu0 0.0
      %1213 = vmatpush1.msra.mxu0 0.0
      %1214 = vmatprep.mubr.f32.mxu0 0.0
      %1215 = vmatmul.mubr.f32.gmra.mrb[0].mxu0 %v1134
      %v1216 = vpop.f32.mrb[0].mxu0
      %v1217 = vadd.f32 0.0, %v1216
      %v1218 = vpop.f32.mrb[0].mxu0
      %1219 = vmatprep.mubr.f32.mxu0 0.0
      %1220 = vmatmul.mubr.f32.gmra.mrb[0].mxu0 %v1136
      %v1221 = vpop.f32.mrb[0].mxu0
      %v1222 = vadd.f32 0.0, %v1221
      %v1223 = vpop.f32.mrb[0].mxu0
      %1224 = vmatprep.mubr.f32.mxu0 0.0
      %1225 = vmatmul.mubr.f32.gmra.mrb[0].mxu0 %v1138
      %v1226 = vpop.f32.mrb[0].mxu0
      %v1227 = vadd.f32 0.0, %v1226
      %v1228 = vpop.f32.mrb[0].mxu0
      %1229 = vmatprep.mubr.f32.mxu0 0.0
      %1230 = vmatmul.mubr.f32.gmra.mrb[0].mxu0 %v1140
      %v1231 = vpop.f32.mrb[0].mxu0
      %v1232 = vadd.f32 0.0, %v1231
      %v1233 = vpop.f32.mrb[0].mxu0
      %1234 = vmatprep.mubr.f32.mxu0 0.0
      %1235 = vmatmul.mubr.f32.gmra.mrb[0].mxu0 %v1142
      %v1236 = vpop.f32.mrb[0].mxu0
      %v1237 = vadd.f32 0.0, %v1236
      %v1238 = vpop.f32.mrb[0].mxu0
      %1239 = vmatprep.mubr.f32.mxu0 0.0
      %1240 = vmatmul.mubr.f32.gmra.mrb[0].mxu0 %v1144
      %v1241 = vpop.f32.mrb[0].mxu0
      %v1242 = vadd.f32 0.0, %v1241
      %v1243 = vpop.f32.mrb[0].mxu0
      %1244 = vmatprep.mubr.f32.mxu0 0.0
      %1245 = vmatmul.mubr.f32.gmra.mrb[0].mxu0 %v1146
      %v1246 = vpop.f32.mrb[0].mxu0
      %v1247 = vadd.f32 0.0, %v1246
      %v1248 = vpop.f32.mrb[0].mxu0
      %1249 = vmatprep.mubr.f32.mxu0 0.0
      %1250 = vmatmul.mubr.f32.gmra.mrb[0].mxu0 %v1148
      %v1251 = vpop.f32.mrb[0].mxu0
      %v1252 = vadd.f32 0.0, %v1251
      %v1253 = vpop.f32.mrb[0].mxu0
      %1254 = vdwg.mxu0
      %v1255 = vsel %vm908, %v1217, -inf
      %1256 = vmax.xlane.f32.xlu0 %v1255
      %v1257 = vpop.xlane.xlu0 %1256
      %v1258 = vsel %vm908, %v1222, -inf
      %1259 = vmax.xlane.f32.xlu0 %v1258
      %v1260 = vpop.xlane.xlu0 %1259
      %v1261 = vsel %vm908, %v1227, -inf
      %1262 = vmax.xlane.f32.xlu0 %v1261
      %v1263 = vpop.xlane.xlu0 %1262
      %v1264 = vsel %vm908, %v1232, -inf
      %1265 = vmax.xlane.f32.xlu0 %v1264
      %v1266 = vpop.xlane.xlu0 %1265
      %v1267 = vsel %vm908, %v1237, -inf
      %1268 = vmax.xlane.f32.xlu0 %v1267
      %v1269 = vpop.xlane.xlu0 %1268
      %v1270 = vsel %vm908, %v1242, -inf
      %1271 = vmax.xlane.f32.xlu0 %v1270
      %v1272 = vpop.xlane.xlu0 %1271
      %v1273 = vsel %vm908, %v1247, -inf
      %1274 = vmax.xlane.f32.xlu0 %v1273
      %v1275 = vpop.xlane.xlu0 %1274
      %v1276 = vsel %vm908, %v1252, -inf
      %1277 = vmax.xlane.f32.xlu0 %v1276
      %v1278 = vpop.xlane.xlu0 %1277
      %v1279 = vsub.f32 %v1217, %v1257
      %v1280 = vsub.f32 %v1222, %v1260
      %v1281 = vsub.f32 %v1227, %v1263
      %v1282 = vsub.f32 %v1232, %v1266
      %v1283 = vsub.f32 %v1237, %v1269
      %v1284 = vsub.f32 %v1242, %v1272
      %v1285 = vsub.f32 %v1247, %v1275
      %v1286 = vsub.f32 %v1252, %v1278
      %v1287 = vmul.f32 %v1279, 1.442695
      %v1288 = vpow.pop %v1287
      %v1289 = vmul.f32 %v1280, 1.442695
      %v1290 = vpow.pop %v1289
      %v1291 = vmul.f32 %v1281, 1.442695
      %v1292 = vpow.pop %v1291
      %v1293 = vmul.f32 %v1282, 1.442695
      %v1294 = vpow.pop %v1293
      %v1295 = vmul.f32 %v1283, 1.442695
      %v1296 = vpow.pop %v1295
      %v1297 = vmul.f32 %v1284, 1.442695
      %v1298 = vpow.pop %v1297
      %v1299 = vmul.f32 %v1285, 1.442695
      %v1300 = vpow.pop %v1299
      %v1301 = vmul.f32 %v1286, 1.442695
      %v1302 = vpow.pop %v1301
      %v1303 = vsel %vm908, %v1288, 0.0
      %1304 = vadd.xlane.f32.xlu0 %v1303
      %v1305 = vpop.xlane.xlu0 %1304
      %v1306 = vsel %vm908, %v1290, 0.0
      %1307 = vadd.xlane.f32.xlu0 %v1306
      %v1308 = vpop.xlane.xlu0 %1307
      %v1309 = vsel %vm908, %v1292, 0.0
      %1310 = vadd.xlane.f32.xlu0 %v1309
      %v1311 = vpop.xlane.xlu0 %1310
      %v1312 = vsel %vm908, %v1294, 0.0
      %1313 = vadd.xlane.f32.xlu0 %v1312
      %v1314 = vpop.xlane.xlu0 %1313
      %v1315 = vsel %vm908, %v1296, 0.0
      %1316 = vadd.xlane.f32.xlu0 %v1315
      %v1317 = vpop.xlane.xlu0 %1316
      %v1318 = vsel %vm908, %v1298, 0.0
      %1319 = vadd.xlane.f32.xlu0 %v1318
      %v1320 = vpop.xlane.xlu0 %1319
      %v1321 = vsel %vm908, %v1300, 0.0
      %1322 = vadd.xlane.f32.xlu0 %v1321
      %v1323 = vpop.xlane.xlu0 %1322
      %v1324 = vsel %vm908, %v1302, 0.0
      %1325 = vadd.xlane.f32.xlu0 %v1324
      %v1326 = vpop.xlane.xlu0 %1325
      %v1327 = vrcp.pop %v1305
      %v1328 = vrcp.pop %v1308
      %v1329 = vrcp.pop %v1311
      %v1330 = vrcp.pop %v1314
      %v1331 = vrcp.pop %v1317
      %v1332 = vrcp.pop %v1320
      %v1333 = vrcp.pop %v1323
      %v1334 = vrcp.pop %v1326
      %v1335 = vmul.f32 %v1288, %v1327
      %v1336 = vmul.f32 %v1290, %v1328
      %v1337 = vmul.f32 %v1292, %v1329
      %v1338 = vmul.f32 %v1294, %v1330
      %v1339 = vmul.f32 %v1296, %v1331
      %v1340 = vmul.f32 %v1298, %v1332
      %v1341 = vmul.f32 %v1300, %v1333
      %v1342 = vmul.f32 %v1302, %v1334
      %v1344 = vsel %vm908, %v700, 0
      %v1347 = vsel %vm908, %v703, 0
      %v1350 = vsel %vm908, %v708, 0
      %v1353 = vsel %vm908, %v711, 0
      %v1356 = vsel %vm908, %v1335, 0
      %v1359 = vsel %vm908, %v1336, 0
      %v1362 = vsel %vm908, %v1337, 0
      %v1365 = vsel %vm908, %v1338, 0
      %v1368 = vsel %vm908, %v1339, 0
      %v1371 = vsel %vm908, %v1340, 0
      %v1374 = vsel %vm908, %v1341, 0
      %v1377 = vsel %vm908, %v1342, 0
      %1379 = vmatprep.subr.mxu0 0.0
      %1380 = vmatpush1.xpose.msra.mxu0 %v1356
      %1381 = vmatprep.subr.mxu0 0.0
      %1382 = vmatpush1.xpose.msra.mxu0 %v1359
      %1383 = vmatprep.subr.mxu0 0.0
      %1384 = vmatpush1.xpose.msra.mxu0 %v1362
      %1385 = vmatprep.subr.mxu0 0.0
      %1386 = vmatpush1.xpose.msra.mxu0 %v1365
      %1387 = vmatprep.subr.mxu0 0.0
      %1388 = vmatpush1.xpose.msra.mxu0 %v1368
      %1389 = vmatprep.subr.mxu0 0.0
      %1390 = vmatpush1.xpose.msra.mxu0 %v1371
      %1391 = vmatprep.subr.mxu0 0.0
      %1392 = vmatpush1.xpose.msra.mxu0 %v1374
      %1393 = vmatprep.subr.mxu0 0.0
      %1394 = vmatpush1.xpose.msra.mxu0 %v1377
      %1395 = vmatprep.subr.mxu0 0.0
      %1396 = vmatpush1.xpose.msra.mxu0 0.0
      %1397 = vmatprep.subr.mxu0 0.0
      %1398 = vmatpush1.xpose.msra.mxu0 0.0
      %1399 = vmatprep.subr.mxu0 0.0
      %1400 = vmatpush1.xpose.msra.mxu0 0.0
      %1401 = vmatprep.subr.mxu0 0.0
      %1402 = vmatpush1.xpose.msra.mxu0 0.0
      %1403 = vmatprep.subr.mxu0 0.0
      %1404 = vmatpush1.xpose.msra.mxu0 0.0
      %1405 = vmatprep.subr.mxu0 0.0
      %1406 = vmatpush1.xpose.msra.mxu0 0.0
      %1407 = vmatprep.subr.mxu0 0.0
      %1408 = vmatpush1.xpose.msra.mxu0 0.0
      %1409 = vmatprep.subr.mxu0 0.0
      %1410 = vmatpush1.xpose.msra.mxu0 0.0
      %1411 = vmatprep.subr.mxu0 0.0
      %1412 = vmatpush1.xpose.msra.mxu0 0.0
      %1413 = vmatprep.subr.mxu0 0.0
      %1414 = vmatpush1.xpose.msra.mxu0 0.0
      %1415 = vmatprep.subr.mxu0 0.0
      %1416 = vmatpush1.xpose.msra.mxu0 0.0
      %1417 = vmatprep.subr.mxu0 0.0
      %1418 = vmatpush1.xpose.msra.mxu0 0.0
      %1419 = vmatprep.subr.mxu0 0.0
      %1420 = vmatpush1.xpose.msra.mxu0 0.0
      %1421 = vmatprep.subr.mxu0 0.0
      %1422 = vmatpush1.xpose.msra.mxu0 0.0
      %1423 = vmatprep.subr.mxu0 0.0
      %1424 = vmatpush1.xpose.msra.mxu0 0.0
      %1425 = vmatprep.subr.mxu0 0.0
      %1426 = vmatpush1.xpose.msra.mxu0 0.0
      %1427 = vmatprep.subr.mxu0 0.0
      %1428 = vmatpush1.xpose.msra.mxu0 0.0
      %1429 = vmatprep.subr.mxu0 0.0
      %1430 = vmatpush1.xpose.msra.mxu0 0.0
      %1431 = vmatprep.subr.mxu0 0.0
      %1432 = vmatpush1.xpose.msra.mxu0 0.0
      %1433 = vmatprep.subr.mxu0 0.0
      %1434 = vmatpush1.xpose.msra.mxu0 0.0
      %1435 = vmatprep.subr.mxu0 0.0
      %1436 = vmatpush1.xpose.msra.mxu0 0.0
      %1437 = vmatprep.subr.mxu0 0.0
      %1438 = vmatpush1.xpose.msra.mxu0 0.0
      %1439 = vmatprep.subr.mxu0 0.0
      %1440 = vmatpush1.xpose.msra.mxu0 0.0
      %1441 = vmatprep.subr.mxu0 0.0
      %1442 = vmatpush1.xpose.msra.mxu0 0.0
      %1443 = vmatprep.mubr.f32.mxu0 0.0
      %1444 = vmatmul.mubr.f32.gmra.mrb[0].mxu0 %v1344
      %v1445 = vpop.f32.mrb[0].mxu0
      %v1446 = vadd.f32 0.0, %v1445
      %v1447 = vpop.f32.mrb[0].mxu0
      %1448 = vmatprep.mubr.f32.mxu0 0.0
      %1449 = vmatmul.mubr.f32.gmra.mrb[0].mxu0 %v1347
      %v1450 = vpop.f32.mrb[0].mxu0
      %v1451 = vadd.f32 0.0, %v1450
      %v1452 = vpop.f32.mrb[0].mxu0
      %1453 = vmatprep.mubr.f32.mxu0 0.0
      %1454 = vmatmul.mubr.f32.gmra.mrb[0].mxu0 %v1350
      %v1455 = vpop.f32.mrb[0].mxu0
      %v1456 = vadd.f32 0.0, %v1455
      %v1457 = vpop.f32.mrb[0].mxu0
      %1458 = vmatprep.mubr.f32.mxu0 0.0
      %1459 = vmatmul.mubr.f32.gmra.mrb[0].mxu0 %v1353
      %v1460 = vpop.f32.mrb[0].mxu0
      %v1461 = vadd.f32 0.0, %v1460
      %v1462 = vpop.f32.mrb[0].mxu0
      %1463 = vdwg.mxu0
      %1464 = vrot.lane.b32.xlu0 %v762, 96
      %v1465 = vpop.permute.xlu0 %1464
      %1466 = vrot.lane.b32.xlu0 %v763, 96
      %v1467 = vpop.permute.xlu0 %1466
      %1468 = vrot.lane.b32.xlu0 %v764, 96
      %v1469 = vpop.permute.xlu0 %1468
      %1470 = vrot.lane.b32.xlu0 %v765, 96
      %v1471 = vpop.permute.xlu0 %1470
      %1472 = vrot.lane.b32.xlu0 %v766, 96
      %v1473 = vpop.permute.xlu0 %1472
      %1474 = vrot.lane.b32.xlu0 %v767, 96
      %v1475 = vpop.permute.xlu0 %1474
      %1476 = vrot.lane.b32.xlu0 %v768, 96
      %v1477 = vpop.permute.xlu0 %1476
      %1478 = vrot.lane.b32.xlu0 %v769, 96
      %v1479 = vpop.permute.xlu0 %1478
      %v1480 = vsel %vm778, %v1465, 0
      %v1482 = vsel %vm778, %v1467, 0
      %v1484 = vsel %vm778, %v1469, 0
      %v1486 = vsel %vm778, %v1471, 0
      %v1488 = vsel %vm778, %v1473, 0
      %v1490 = vsel %vm778, %v1475, 0
      %v1492 = vsel %vm778, %v1477, 0
      %v1494 = vsel %vm778, %v1479, 0
      %1496 = vmatprep.subr.mxu0 0.0
      %1497 = vmatpush1.msra.mxu0 %v668
      %1498 = vmatprep.subr.mxu0 0.0
      %1499 = vmatpush1.msra.mxu0 %v671
      %1500 = vmatprep.subr.mxu0 0.0
      %1501 = vmatpush1.msra.mxu0 0.0
      %1502 = vmatprep.subr.mxu0 0.0
      %1503 = vmatpush1.msra.mxu0 0.0
      %1504 = vmatprep.subr.mxu0 0.0
      %1505 = vmatpush1.msra.mxu0 0.0
      %1506 = vmatprep.subr.mxu0 0.0
      %1507 = vmatpush1.msra.mxu0 0.0
      %1508 = vmatprep.subr.mxu0 0.0
      %1509 = vmatpush1.msra.mxu0 0.0
      %1510 = vmatprep.subr.mxu0 0.0
      %1511 = vmatpush1.msra.mxu0 0.0
      %1512 = vmatprep.subr.mxu0 0.0
      %1513 = vmatpush1.msra.mxu0 0.0
      %1514 = vmatprep.subr.mxu0 0.0
      %1515 = vmatpush1.msra.mxu0 0.0
      %1516 = vmatprep.subr.mxu0 0.0
      %1517 = vmatpush1.msra.mxu0 0.0
      %1518 = vmatprep.subr.mxu0 0.0
      %1519 = vmatpush1.msra.mxu0 0.0
      %1520 = vmatprep.subr.mxu0 0.0
      %1521 = vmatpush1.msra.mxu0 0.0
      %1522 = vmatprep.subr.mxu0 0.0
      %1523 = vmatpush1.msra.mxu0 0.0
      %1524 = vmatprep.subr.mxu0 0.0
      %1525 = vmatpush1.msra.mxu0 0.0
      %1526 = vmatprep.subr.mxu0 0.0
      %1527 = vmatpush1.msra.mxu0 0.0
      %1528 = vmatprep.subr.mxu0 0.0
      %1529 = vmatpush1.msra.mxu0 0.0
      %1530 = vmatprep.subr.mxu0 0.0
      %1531 = vmatpush1.msra.mxu0 0.0
      %1532 = vmatprep.subr.mxu0 0.0
      %1533 = vmatpush1.msra.mxu0 0.0
      %1534 = vmatprep.subr.mxu0 0.0
      %1535 = vmatpush1.msra.mxu0 0.0
      %1536 = vmatprep.subr.mxu0 0.0
      %1537 = vmatpush1.msra.mxu0 0.0
      %1538 = vmatprep.subr.mxu0 0.0
      %1539 = vmatpush1.msra.mxu0 0.0
      %1540 = vmatprep.subr.mxu0 0.0
      %1541 = vmatpush1.msra.mxu0 0.0
      %1542 = vmatprep.subr.mxu0 0.0
      %1543 = vmatpush1.msra.mxu0 0.0
      %1544 = vmatprep.subr.mxu0 0.0
      %1545 = vmatpush1.msra.mxu0 0.0
      %1546 = vmatprep.subr.mxu0 0.0
      %1547 = vmatpush1.msra.mxu0 0.0
      %1548 = vmatprep.subr.mxu0 0.0
      %1549 = vmatpush1.msra.mxu0 0.0
      %1550 = vmatprep.subr.mxu0 0.0
      %1551 = vmatpush1.msra.mxu0 0.0
      %1552 = vmatprep.subr.mxu0 0.0
      %1553 = vmatpush1.msra.mxu0 0.0
      %1554 = vmatprep.subr.mxu0 0.0
      %1555 = vmatpush1.msra.mxu0 0.0
      %1556 = vmatprep.subr.mxu0 0.0
      %1557 = vmatpush1.msra.mxu0 0.0
      %1558 = vmatprep.subr.mxu0 0.0
      %1559 = vmatpush1.msra.mxu0 0.0
      %1560 = vmatprep.mubr.f32.mxu0 0.0
      %1561 = vmatmul.mubr.f32.gmra.mrb[0].mxu0 %v1480
      %v1562 = vpop.f32.mrb[0].mxu0
      %v1563 = vadd.f32 0.0, %v1562
      %v1564 = vpop.f32.mrb[0].mxu0
      %1565 = vmatprep.mubr.f32.mxu0 0.0
      %1566 = vmatmul.mubr.f32.gmra.mrb[0].mxu0 %v1482
      %v1567 = vpop.f32.mrb[0].mxu0
      %v1568 = vadd.f32 0.0, %v1567
      %v1569 = vpop.f32.mrb[0].mxu0
      %1570 = vmatprep.mubr.f32.mxu0 0.0
      %1571 = vmatmul.mubr.f32.gmra.mrb[0].mxu0 %v1484
      %v1572 = vpop.f32.mrb[0].mxu0
      %v1573 = vadd.f32 0.0, %v1572
      %v1574 = vpop.f32.mrb[0].mxu0
      %1575 = vmatprep.mubr.f32.mxu0 0.0
      %1576 = vmatmul.mubr.f32.gmra.mrb[0].mxu0 %v1486
      %v1577 = vpop.f32.mrb[0].mxu0
      %v1578 = vadd.f32 0.0, %v1577
      %v1579 = vpop.f32.mrb[0].mxu0
      %1580 = vmatprep.mubr.f32.mxu0 0.0
      %1581 = vmatmul.mubr.f32.gmra.mrb[0].mxu0 %v1488
      %v1582 = vpop.f32.mrb[0].mxu0
      %v1583 = vadd.f32 0.0, %v1582
      %v1584 = vpop.f32.mrb[0].mxu0
      %1585 = vmatprep.mubr.f32.mxu0 0.0
      %1586 = vmatmul.mubr.f32.gmra.mrb[0].mxu0 %v1490
      %v1587 = vpop.f32.mrb[0].mxu0
      %v1588 = vadd.f32 0.0, %v1587
      %v1589 = vpop.f32.mrb[0].mxu0
      %1590 = vmatprep.mubr.f32.mxu0 0.0
      %1591 = vmatmul.mubr.f32.gmra.mrb[0].mxu0 %v1492
      %v1592 = vpop.f32.mrb[0].mxu0
      %v1593 = vadd.f32 0.0, %v1592
      %v1594 = vpop.f32.mrb[0].mxu0
      %1595 = vmatprep.mubr.f32.mxu0 0.0
      %1596 = vmatmul.mubr.f32.gmra.mrb[0].mxu0 %v1494
      %v1597 = vpop.f32.mrb[0].mxu0
      %v1598 = vadd.f32 0.0, %v1597
      %v1599 = vpop.f32.mrb[0].mxu0
      %1600 = vdwg.mxu0
      %v1601 = vsel %vm908, %v1563, -inf
      %1602 = vmax.xlane.f32.xlu0 %v1601
      %v1603 = vpop.xlane.xlu0 %1602
      %v1604 = vsel %vm908, %v1568, -inf
      %1605 = vmax.xlane.f32.xlu0 %v1604
      %v1606 = vpop.xlane.xlu0 %1605
      %v1607 = vsel %vm908, %v1573, -inf
      %1608 = vmax.xlane.f32.xlu0 %v1607
      %v1609 = vpop.xlane.xlu0 %1608
      %v1610 = vsel %vm908, %v1578, -inf
      %1611 = vmax.xlane.f32.xlu0 %v1610
      %v1612 = vpop.xlane.xlu0 %1611
      %v1613 = vsel %vm908, %v1583, -inf
      %1614 = vmax.xlane.f32.xlu0 %v1613
      %v1615 = vpop.xlane.xlu0 %1614
      %v1616 = vsel %vm908, %v1588, -inf
      %1617 = vmax.xlane.f32.xlu0 %v1616
      %v1618 = vpop.xlane.xlu0 %1617
      %v1619 = vsel %vm908, %v1593, -inf
      %1620 = vmax.xlane.f32.xlu0 %v1619
      %v1621 = vpop.xlane.xlu0 %1620
      %v1622 = vsel %vm908, %v1598, -inf
      %1623 = vmax.xlane.f32.xlu0 %v1622
      %v1624 = vpop.xlane.xlu0 %1623
      %v1625 = vsub.f32 %v1563, %v1603
      %v1626 = vsub.f32 %v1568, %v1606
      %v1627 = vsub.f32 %v1573, %v1609
      %v1628 = vsub.f32 %v1578, %v1612
      %v1629 = vsub.f32 %v1583, %v1615
      %v1630 = vsub.f32 %v1588, %v1618
      %v1631 = vsub.f32 %v1593, %v1621
      %v1632 = vsub.f32 %v1598, %v1624
      %v1633 = vmul.f32 %v1625, 1.442695
      %v1634 = vpow.pop %v1633
      %v1635 = vmul.f32 %v1626, 1.442695
      %v1636 = vpow.pop %v1635
      %v1637 = vmul.f32 %v1627, 1.442695
      %v1638 = vpow.pop %v1637
      %v1639 = vmul.f32 %v1628, 1.442695
      %v1640 = vpow.pop %v1639
      %v1641 = vmul.f32 %v1629, 1.442695
      %v1642 = vpow.pop %v1641
      %v1643 = vmul.f32 %v1630, 1.442695
      %v1644 = vpow.pop %v1643
      %v1645 = vmul.f32 %v1631, 1.442695
      %v1646 = vpow.pop %v1645
      %v1647 = vmul.f32 %v1632, 1.442695
      %v1648 = vpow.pop %v1647
      %v1649 = vsel %vm908, %v1634, 0.0
      %1650 = vadd.xlane.f32.xlu0 %v1649
      %v1651 = vpop.xlane.xlu0 %1650
      %v1652 = vsel %vm908, %v1636, 0.0
      %1653 = vadd.xlane.f32.xlu0 %v1652
      %v1654 = vpop.xlane.xlu0 %1653
      %v1655 = vsel %vm908, %v1638, 0.0
      %1656 = vadd.xlane.f32.xlu0 %v1655
      %v1657 = vpop.xlane.xlu0 %1656
      %v1658 = vsel %vm908, %v1640, 0.0
      %1659 = vadd.xlane.f32.xlu0 %v1658
      %v1660 = vpop.xlane.xlu0 %1659
      %v1661 = vsel %vm908, %v1642, 0.0
      %1662 = vadd.xlane.f32.xlu0 %v1661
      %v1663 = vpop.xlane.xlu0 %1662
      %v1664 = vsel %vm908, %v1644, 0.0
      %1665 = vadd.xlane.f32.xlu0 %v1664
      %v1666 = vpop.xlane.xlu0 %1665
      %v1667 = vsel %vm908, %v1646, 0.0
      %1668 = vadd.xlane.f32.xlu0 %v1667
      %v1669 = vpop.xlane.xlu0 %1668
      %v1670 = vsel %vm908, %v1648, 0.0
      %1671 = vadd.xlane.f32.xlu0 %v1670
      %v1672 = vpop.xlane.xlu0 %1671
      %v1673 = vrcp.pop %v1651
      %v1674 = vrcp.pop %v1654
      %v1675 = vrcp.pop %v1657
      %v1676 = vrcp.pop %v1660
      %v1677 = vrcp.pop %v1663
      %v1678 = vrcp.pop %v1666
      %v1679 = vrcp.pop %v1669
      %v1680 = vrcp.pop %v1672
      %v1681 = vmul.f32 %v1634, %v1673
      %v1682 = vmul.f32 %v1636, %v1674
      %v1683 = vmul.f32 %v1638, %v1675
      %v1684 = vmul.f32 %v1640, %v1676
      %v1685 = vmul.f32 %v1642, %v1677
      %v1686 = vmul.f32 %v1644, %v1678
      %v1687 = vmul.f32 %v1646, %v1679
      %v1688 = vmul.f32 %v1648, %v1680
      %v1690 = vsel %vm908, %v716, 0
      %v1693 = vsel %vm908, %v719, 0
      %v1696 = vsel %vm908, %v724, 0
      %v1699 = vsel %vm908, %v727, 0
      %v1702 = vsel %vm908, %v1681, 0
      %v1705 = vsel %vm908, %v1682, 0
      %v1708 = vsel %vm908, %v1683, 0
      %v1711 = vsel %vm908, %v1684, 0
      %v1714 = vsel %vm908, %v1685, 0
      %v1717 = vsel %vm908, %v1686, 0
      %v1720 = vsel %vm908, %v1687, 0
      %v1723 = vsel %vm908, %v1688, 0
      %1725 = vmatprep.subr.mxu0 0.0
      %1726 = vmatpush1.xpose.msra.mxu0 %v1702
      %1727 = vmatprep.subr.mxu0 0.0
      %1728 = vmatpush1.xpose.msra.mxu0 %v1705
      %1729 = vmatprep.subr.mxu0 0.0
      %1730 = vmatpush1.xpose.msra.mxu0 %v1708
      %1731 = vmatprep.subr.mxu0 0.0
      %1732 = vmatpush1.xpose.msra.mxu0 %v1711
      %1733 = vmatprep.subr.mxu0 0.0
      %1734 = vmatpush1.xpose.msra.mxu0 %v1714
      %1735 = vmatprep.subr.mxu0 0.0
      %1736 = vmatpush1.xpose.msra.mxu0 %v1717
      %1737 = vmatprep.subr.mxu0 0.0
      %1738 = vmatpush1.xpose.msra.mxu0 %v1720
      %1739 = vmatprep.subr.mxu0 0.0
      %1740 = vmatpush1.xpose.msra.mxu0 %v1723
      %1741 = vmatprep.subr.mxu0 0.0
      %1742 = vmatpush1.xpose.msra.mxu0 0.0
      %1743 = vmatprep.subr.mxu0 0.0
      %1744 = vmatpush1.xpose.msra.mxu0 0.0
      %1745 = vmatprep.subr.mxu0 0.0
      %1746 = vmatpush1.xpose.msra.mxu0 0.0
      %1747 = vmatprep.subr.mxu0 0.0
      %1748 = vmatpush1.xpose.msra.mxu0 0.0
      %1749 = vmatprep.subr.mxu0 0.0
      %1750 = vmatpush1.xpose.msra.mxu0 0.0
      %1751 = vmatprep.subr.mxu0 0.0
      %1752 = vmatpush1.xpose.msra.mxu0 0.0
      %1753 = vmatprep.subr.mxu0 0.0
      %1754 = vmatpush1.xpose.msra.mxu0 0.0
      %1755 = vmatprep.subr.mxu0 0.0
      %1756 = vmatpush1.xpose.msra.mxu0 0.0
      %1757 = vmatprep.subr.mxu0 0.0
      %1758 = vmatpush1.xpose.msra.mxu0 0.0
      %1759 = vmatprep.subr.mxu0 0.0
      %1760 = vmatpush1.xpose.msra.mxu0 0.0
      %1761 = vmatprep.subr.mxu0 0.0
      %1762 = vmatpush1.xpose.msra.mxu0 0.0
      %1763 = vmatprep.subr.mxu0 0.0
      %1764 = vmatpush1.xpose.msra.mxu0 0.0
      %1765 = vmatprep.subr.mxu0 0.0
      %1766 = vmatpush1.xpose.msra.mxu0 0.0
      %1767 = vmatprep.subr.mxu0 0.0
      %1768 = vmatpush1.xpose.msra.mxu0 0.0
      %1769 = vmatprep.subr.mxu0 0.0
      %1770 = vmatpush1.xpose.msra.mxu0 0.0
      %1771 = vmatprep.subr.mxu0 0.0
      %1772 = vmatpush1.xpose.msra.mxu0 0.0
      %1773 = vmatprep.subr.mxu0 0.0
      %1774 = vmatpush1.xpose.msra.mxu0 0.0
      %1775 = vmatprep.subr.mxu0 0.0
      %1776 = vmatpush1.xpose.msra.mxu0 0.0
      %1777 = vmatprep.subr.mxu0 0.0
      %1778 = vmatpush1.xpose.msra.mxu0 0.0
      %1779 = vmatprep.subr.mxu0 0.0
      %1780 = vmatpush1.xpose.msra.mxu0 0.0
      %1781 = vmatprep.subr.mxu0 0.0
      %1782 = vmatpush1.xpose.msra.mxu0 0.0
      %1783 = vmatprep.subr.mxu0 0.0
      %1784 = vmatpush1.xpose.msra.mxu0 0.0
      %1785 = vmatprep.subr.mxu0 0.0
      %1786 = vmatpush1.xpose.msra.mxu0 0.0
      %1787 = vmatprep.subr.mxu0 0.0
      %1788 = vmatpush1.xpose.msra.mxu0 0.0
      %1789 = vmatprep.mubr.f32.mxu0 0.0
      %1790 = vmatmul.mubr.f32.gmra.mrb[0].mxu0 %v1690
      %v1791 = vpop.f32.mrb[0].mxu0
      %v1792 = vadd.f32 0.0, %v1791
      %v1793 = vpop.f32.mrb[0].mxu0
      %1794 = vmatprep.mubr.f32.mxu0 0.0
      %1795 = vmatmul.mubr.f32.gmra.mrb[0].mxu0 %v1693
      %v1796 = vpop.f32.mrb[0].mxu0
      %v1797 = vadd.f32 0.0, %v1796
      %v1798 = vpop.f32.mrb[0].mxu0
      %1799 = vmatprep.mubr.f32.mxu0 0.0
      %1800 = vmatmul.mubr.f32.gmra.mrb[0].mxu0 %v1696
      %v1801 = vpop.f32.mrb[0].mxu0
      %v1802 = vadd.f32 0.0, %v1801
      %v1803 = vpop.f32.mrb[0].mxu0
      %1804 = vmatprep.mubr.f32.mxu0 0.0
      %1805 = vmatmul.mubr.f32.gmra.mrb[0].mxu0 %v1699
      %v1806 = vpop.f32.mrb[0].mxu0
      %v1807 = vadd.f32 0.0, %v1806
      %v1808 = vpop.f32.mrb[0].mxu0
      %1809 = vdwg.mxu0
      %1810 = vrot.lane.b32.xlu0 %v762, 80
      %v1811 = vpop.permute.xlu0 %1810
      %1812 = vrot.lane.b32.xlu0 %v763, 80
      %v1813 = vpop.permute.xlu0 %1812
      %1814 = vrot.lane.b32.xlu0 %v764, 80
      %v1815 = vpop.permute.xlu0 %1814
      %1816 = vrot.lane.b32.xlu0 %v765, 80
      %v1817 = vpop.permute.xlu0 %1816
      %1818 = vrot.lane.b32.xlu0 %v766, 80
      %v1819 = vpop.permute.xlu0 %1818
      %1820 = vrot.lane.b32.xlu0 %v767, 80
      %v1821 = vpop.permute.xlu0 %1820
      %1822 = vrot.lane.b32.xlu0 %v768, 80
      %v1823 = vpop.permute.xlu0 %1822
      %1824 = vrot.lane.b32.xlu0 %v769, 80
      %v1825 = vpop.permute.xlu0 %1824
      %v1826 = vsel %vm778, %v1811, 0
      %v1828 = vsel %vm778, %v1813, 0
      %v1830 = vsel %vm778, %v1815, 0
      %v1832 = vsel %vm778, %v1817, 0
      %v1834 = vsel %vm778, %v1819, 0
      %v1836 = vsel %vm778, %v1821, 0
      %v1838 = vsel %vm778, %v1823, 0
      %v1840 = vsel %vm778, %v1825, 0
      %1842 = vmatprep.subr.mxu0 0.0
      %1843 = vmatpush1.msra.mxu0 %v676
      %1844 = vmatprep.subr.mxu0 0.0
      %1845 = vmatpush1.msra.mxu0 %v679
      %1846 = vmatprep.subr.mxu0 0.0
      %1847 = vmatpush1.msra.mxu0 0.0
      %1848 = vmatprep.subr.mxu0 0.0
      %1849 = vmatpush1.msra.mxu0 0.0
      %1850 = vmatprep.subr.mxu0 0.0
      %1851 = vmatpush1.msra.mxu0 0.0
      %1852 = vmatprep.subr.mxu0 0.0
      %1853 = vmatpush1.msra.mxu0 0.0
      %1854 = vmatprep.subr.mxu0 0.0
      %1855 = vmatpush1.msra.mxu0 0.0
      %1856 = vmatprep.subr.mxu0 0.0
      %1857 = vmatpush1.msra.mxu0 0.0
      %1858 = vmatprep.subr.mxu0 0.0
      %1859 = vmatpush1.msra.mxu0 0.0
      %1860 = vmatprep.subr.mxu0 0.0
      %1861 = vmatpush1.msra.mxu0 0.0
      %1862 = vmatprep.subr.mxu0 0.0
      %1863 = vmatpush1.msra.mxu0 0.0
      %1864 = vmatprep.subr.mxu0 0.0
      %1865 = vmatpush1.msra.mxu0 0.0
      %1866 = vmatprep.subr.mxu0 0.0
      %1867 = vmatpush1.msra.mxu0 0.0
      %1868 = vmatprep.subr.mxu0 0.0
      %1869 = vmatpush1.msra.mxu0 0.0
      %1870 = vmatprep.subr.mxu0 0.0
      %1871 = vmatpush1.msra.mxu0 0.0
      %1872 = vmatprep.subr.mxu0 0.0
      %1873 = vmatpush1.msra.mxu0 0.0
      %1874 = vmatprep.subr.mxu0 0.0
      %1875 = vmatpush1.msra.mxu0 0.0
      %1876 = vmatprep.subr.mxu0 0.0
      %1877 = vmatpush1.msra.mxu0 0.0
      %1878 = vmatprep.subr.mxu0 0.0
      %1879 = vmatpush1.msra.mxu0 0.0
      %1880 = vmatprep.subr.mxu0 0.0
      %1881 = vmatpush1.msra.mxu0 0.0
      %1882 = vmatprep.subr.mxu0 0.0
      %1883 = vmatpush1.msra.mxu0 0.0
      %1884 = vmatprep.subr.mxu0 0.0
      %1885 = vmatpush1.msra.mxu0 0.0
      %1886 = vmatprep.subr.mxu0 0.0
      %1887 = vmatpush1.msra.mxu0 0.0
      %1888 = vmatprep.subr.mxu0 0.0
      %1889 = vmatpush1.msra.mxu0 0.0
      %1890 = vmatprep.subr.mxu0 0.0
      %1891 = vmatpush1.msra.mxu0 0.0
      %1892 = vmatprep.subr.mxu0 0.0
      %1893 = vmatpush1.msra.mxu0 0.0
      %1894 = vmatprep.subr.mxu0 0.0
      %1895 = vmatpush1.msra.mxu0 0.0
      %1896 = vmatprep.subr.mxu0 0.0
      %1897 = vmatpush1.msra.mxu0 0.0
      %1898 = vmatprep.subr.mxu0 0.0
      %1899 = vmatpush1.msra.mxu0 0.0
      %1900 = vmatprep.subr.mxu0 0.0
      %1901 = vmatpush1.msra.mxu0 0.0
      %1902 = vmatprep.subr.mxu0 0.0
      %1903 = vmatpush1.msra.mxu0 0.0
      %1904 = vmatprep.subr.mxu0 0.0
      %1905 = vmatpush1.msra.mxu0 0.0
      %1906 = vmatprep.mubr.f32.mxu0 0.0
      %1907 = vmatmul.mubr.f32.gmra.mrb[0].mxu0 %v1826
      %v1908 = vpop.f32.mrb[0].mxu0
      %v1909 = vadd.f32 0.0, %v1908
      %v1910 = vpop.f32.mrb[0].mxu0
      %1911 = vmatprep.mubr.f32.mxu0 0.0
      %1912 = vmatmul.mubr.f32.gmra.mrb[0].mxu0 %v1828
      %v1913 = vpop.f32.mrb[0].mxu0
      %v1914 = vadd.f32 0.0, %v1913
      %v1915 = vpop.f32.mrb[0].mxu0
      %1916 = vmatprep.mubr.f32.mxu0 0.0
      %1917 = vmatmul.mubr.f32.gmra.mrb[0].mxu0 %v1830
      %v1918 = vpop.f32.mrb[0].mxu0
      %v1919 = vadd.f32 0.0, %v1918
      %v1920 = vpop.f32.mrb[0].mxu0
      %1921 = vmatprep.mubr.f32.mxu0 0.0
      %1922 = vmatmul.mubr.f32.gmra.mrb[0].mxu0 %v1832
      %v1923 = vpop.f32.mrb[0].mxu0
      %v1924 = vadd.f32 0.0, %v1923
      %v1925 = vpop.f32.mrb[0].mxu0
      %1926 = vmatprep.mubr.f32.mxu0 0.0
      %1927 = vmatmul.mubr.f32.gmra.mrb[0].mxu0 %v1834
      %v1928 = vpop.f32.mrb[0].mxu0
      %v1929 = vadd.f32 0.0, %v1928
      %v1930 = vpop.f32.mrb[0].mxu0
      %1931 = vmatprep.mubr.f32.mxu0 0.0
      %1932 = vmatmul.mubr.f32.gmra.mrb[0].mxu0 %v1836
      %v1933 = vpop.f32.mrb[0].mxu0
      %v1934 = vadd.f32 0.0, %v1933
      %v1935 = vpop.f32.mrb[0].mxu0
      %1936 = vmatprep.mubr.f32.mxu0 0.0
      %1937 = vmatmul.mubr.f32.gmra.mrb[0].mxu0 %v1838
      %v1938 = vpop.f32.mrb[0].mxu0
      %v1939 = vadd.f32 0.0, %v1938
      %v1940 = vpop.f32.mrb[0].mxu0
      %1941 = vmatprep.mubr.f32.mxu0 0.0
      %1942 = vmatmul.mubr.f32.gmra.mrb[0].mxu0 %v1840
      %v1943 = vpop.f32.mrb[0].mxu0
      %v1944 = vadd.f32 0.0, %v1943
      %v1945 = vpop.f32.mrb[0].mxu0
      %1946 = vdwg.mxu0
      %v1947 = vsel %vm908, %v1909, -inf
      %1948 = vmax.xlane.f32.xlu0 %v1947
      %v1949 = vpop.xlane.xlu0 %1948
      %v1950 = vsel %vm908, %v1914, -inf
      %1951 = vmax.xlane.f32.xlu0 %v1950
      %v1952 = vpop.xlane.xlu0 %1951
      %v1953 = vsel %vm908, %v1919, -inf
      %1954 = vmax.xlane.f32.xlu0 %v1953
      %v1955 = vpop.xlane.xlu0 %1954
      %v1956 = vsel %vm908, %v1924, -inf
      %1957 = vmax.xlane.f32.xlu0 %v1956
      %v1958 = vpop.xlane.xlu0 %1957
      %v1959 = vsel %vm908, %v1929, -inf
      %1960 = vmax.xlane.f32.xlu0 %v1959
      %v1961 = vpop.xlane.xlu0 %1960
      %v1962 = vsel %vm908, %v1934, -inf
      %1963 = vmax.xlane.f32.xlu0 %v1962
      %v1964 = vpop.xlane.xlu0 %1963
      %v1965 = vsel %vm908, %v1939, -inf
      %1966 = vmax.xlane.f32.xlu0 %v1965
      %v1967 = vpop.xlane.xlu0 %1966
      %v1968 = vsel %vm908, %v1944, -inf
      %1969 = vmax.xlane.f32.xlu0 %v1968
      %v1970 = vpop.xlane.xlu0 %1969
      %v1971 = vsub.f32 %v1909, %v1949
      %v1972 = vsub.f32 %v1914, %v1952
      %v1973 = vsub.f32 %v1919, %v1955
      %v1974 = vsub.f32 %v1924, %v1958
      %v1975 = vsub.f32 %v1929, %v1961
      %v1976 = vsub.f32 %v1934, %v1964
      %v1977 = vsub.f32 %v1939, %v1967
      %v1978 = vsub.f32 %v1944, %v1970
      %v1979 = vmul.f32 %v1971, 1.442695
      %v1980 = vpow.pop %v1979
      %v1981 = vmul.f32 %v1972, 1.442695
      %v1982 = vpow.pop %v1981
      %v1983 = vmul.f32 %v1973, 1.442695
      %v1984 = vpow.pop %v1983
      %v1985 = vmul.f32 %v1974, 1.442695
      %v1986 = vpow.pop %v1985
      %v1987 = vmul.f32 %v1975, 1.442695
      %v1988 = vpow.pop %v1987
      %v1989 = vmul.f32 %v1976, 1.442695
      %v1990 = vpow.pop %v1989
      %v1991 = vmul.f32 %v1977, 1.442695
      %v1992 = vpow.pop %v1991
      %v1993 = vmul.f32 %v1978, 1.442695
      %v1994 = vpow.pop %v1993
      %v1995 = vsel %vm908, %v1980, 0.0
      %1996 = vadd.xlane.f32.xlu0 %v1995
      %v1997 = vpop.xlane.xlu0 %1996
      %v1998 = vsel %vm908, %v1982, 0.0
      %1999 = vadd.xlane.f32.xlu0 %v1998
      %v2000 = vpop.xlane.xlu0 %1999
      %v2001 = vsel %vm908, %v1984, 0.0
      %2002 = vadd.xlane.f32.xlu0 %v2001
      %v2003 = vpop.xlane.xlu0 %2002
      %v2004 = vsel %vm908, %v1986, 0.0
      %2005 = vadd.xlane.f32.xlu0 %v2004
      %v2006 = vpop.xlane.xlu0 %2005
      %v2007 = vsel %vm908, %v1988, 0.0
      %2008 = vadd.xlane.f32.xlu0 %v2007
      %v2009 = vpop.xlane.xlu0 %2008
      %v2010 = vsel %vm908, %v1990, 0.0
      %2011 = vadd.xlane.f32.xlu0 %v2010
      %v2012 = vpop.xlane.xlu0 %2011
      %v2013 = vsel %vm908, %v1992, 0.0
      %2014 = vadd.xlane.f32.xlu0 %v2013
      %v2015 = vpop.xlane.xlu0 %2014
      %v2016 = vsel %vm908, %v1994, 0.0
      %2017 = vadd.xlane.f32.xlu0 %v2016
      %v2018 = vpop.xlane.xlu0 %2017
      %v2019 = vrcp.pop %v1997
      %v2020 = vrcp.pop %v2000
      %v2021 = vrcp.pop %v2003
      %v2022 = vrcp.pop %v2006
      %v2023 = vrcp.pop %v2009
      %v2024 = vrcp.pop %v2012
      %v2025 = vrcp.pop %v2015
      %v2026 = vrcp.pop %v2018
      %v2027 = vmul.f32 %v1980, %v2019
      %v2028 = vmul.f32 %v1982, %v2020
      %v2029 = vmul.f32 %v1984, %v2021
      %v2030 = vmul.f32 %v1986, %v2022
      %v2031 = vmul.f32 %v1988, %v2023
      %v2032 = vmul.f32 %v1990, %v2024
      %v2033 = vmul.f32 %v1992, %v2025
      %v2034 = vmul.f32 %v1994, %v2026
      %v2036 = vsel %vm908, %v732, 0
      %v2039 = vsel %vm908, %v735, 0
      %v2042 = vsel %vm908, %v740, 0
      %v2045 = vsel %vm908, %v743, 0
      %v2048 = vsel %vm908, %v2027, 0
      %v2051 = vsel %vm908, %v2028, 0
      %v2054 = vsel %vm908, %v2029, 0
      %v2057 = vsel %vm908, %v2030, 0
      %v2060 = vsel %vm908, %v2031, 0
      %v2063 = vsel %vm908, %v2032, 0
      %v2066 = vsel %vm908, %v2033, 0
      %v2069 = vsel %vm908, %v2034, 0
      %2071 = vmatprep.subr.mxu0 0.0
      %2072 = vmatpush1.xpose.msra.mxu0 %v2048
      %2073 = vmatprep.subr.mxu0 0.0
      %2074 = vmatpush1.xpose.msra.mxu0 %v2051
      %2075 = vmatprep.subr.mxu0 0.0
      %2076 = vmatpush1.xpose.msra.mxu0 %v2054
      %2077 = vmatprep.subr.mxu0 0.0
      %2078 = vmatpush1.xpose.msra.mxu0 %v2057
      %2079 = vmatprep.subr.mxu0 0.0
      %2080 = vmatpush1.xpose.msra.mxu0 %v2060
      %2081 = vmatprep.subr.mxu0 0.0
      %2082 = vmatpush1.xpose.msra.mxu0 %v2063
      %2083 = vmatprep.subr.mxu0 0.0
      %2084 = vmatpush1.xpose.msra.mxu0 %v2066
      %2085 = vmatprep.subr.mxu0 0.0
      %2086 = vmatpush1.xpose.msra.mxu0 %v2069
      %2087 = vmatprep.subr.mxu0 0.0
      %2088 = vmatpush1.xpose.msra.mxu0 0.0
      %2089 = vmatprep.subr.mxu0 0.0
      %2090 = vmatpush1.xpose.msra.mxu0 0.0
      %2091 = vmatprep.subr.mxu0 0.0
      %2092 = vmatpush1.xpose.msra.mxu0 0.0
      %2093 = vmatprep.subr.mxu0 0.0
      %2094 = vmatpush1.xpose.msra.mxu0 0.0
      %2095 = vmatprep.subr.mxu0 0.0
      %2096 = vmatpush1.xpose.msra.mxu0 0.0
      %2097 = vmatprep.subr.mxu0 0.0
      %2098 = vmatpush1.xpose.msra.mxu0 0.0
      %2099 = vmatprep.subr.mxu0 0.0
      %2100 = vmatpush1.xpose.msra.mxu0 0.0
      %2101 = vmatprep.subr.mxu0 0.0
      %2102 = vmatpush1.xpose.msra.mxu0 0.0
      %2103 = vmatprep.subr.mxu0 0.0
      %2104 = vmatpush1.xpose.msra.mxu0 0.0
      %2105 = vmatprep.subr.mxu0 0.0
      %2106 = vmatpush1.xpose.msra.mxu0 0.0
      %2107 = vmatprep.subr.mxu0 0.0
      %2108 = vmatpush1.xpose.msra.mxu0 0.0
      %2109 = vmatprep.subr.mxu0 0.0
      %2110 = vmatpush1.xpose.msra.mxu0 0.0
      %2111 = vmatprep.subr.mxu0 0.0
      %2112 = vmatpush1.xpose.msra.mxu0 0.0
      %2113 = vmatprep.subr.mxu0 0.0
      %2114 = vmatpush1.xpose.msra.mxu0 0.0
      %2115 = vmatprep.subr.mxu0 0.0
      %2116 = vmatpush1.xpose.msra.mxu0 0.0
      %2117 = vmatprep.subr.mxu0 0.0
      %2118 = vmatpush1.xpose.msra.mxu0 0.0
      %2119 = vmatprep.subr.mxu0 0.0
      %2120 = vmatpush1.xpose.msra.mxu0 0.0
      %2121 = vmatprep.subr.mxu0 0.0
      %2122 = vmatpush1.xpose.msra.mxu0 0.0
      %2123 = vmatprep.subr.mxu0 0.0
      %2124 = vmatpush1.xpose.msra.mxu0 0.0
      %2125 = vmatprep.subr.mxu0 0.0
      %2126 = vmatpush1.xpose.msra.mxu0 0.0
      %2127 = vmatprep.subr.mxu0 0.0
      %2128 = vmatpush1.xpose.msra.mxu0 0.0
      %2129 = vmatprep.subr.mxu0 0.0
      %2130 = vmatpush1.xpose.msra.mxu0 0.0
      %2131 = vmatprep.subr.mxu0 0.0
      %2132 = vmatpush1.xpose.msra.mxu0 0.0
      %2133 = vmatprep.subr.mxu0 0.0
      %2134 = vmatpush1.xpose.msra.mxu0 0.0
      %2135 = vmatprep.mubr.f32.mxu0 0.0
      %2136 = vmatmul.mubr.f32.gmra.mrb[0].mxu0 %v2036
      %v2137 = vpop.f32.mrb[0].mxu0
      %v2138 = vadd.f32 0.0, %v2137
      %v2139 = vpop.f32.mrb[0].mxu0
      %2140 = vmatprep.mubr.f32.mxu0 0.0
      %2141 = vmatmul.mubr.f32.gmra.mrb[0].mxu0 %v2039
      %v2142 = vpop.f32.mrb[0].mxu0
      %v2143 = vadd.f32 0.0, %v2142
      %v2144 = vpop.f32.mrb[0].mxu0
      %2145 = vmatprep.mubr.f32.mxu0 0.0
      %2146 = vmatmul.mubr.f32.gmra.mrb[0].mxu0 %v2042
      %v2147 = vpop.f32.mrb[0].mxu0
      %v2148 = vadd.f32 0.0, %v2147
      %v2149 = vpop.f32.mrb[0].mxu0
      %2150 = vmatprep.mubr.f32.mxu0 0.0
      %2151 = vmatmul.mubr.f32.gmra.mrb[0].mxu0 %v2045
      %v2152 = vpop.f32.mrb[0].mxu0
      %v2153 = vadd.f32 0.0, %v2152
      %v2154 = vpop.f32.mrb[0].mxu0
      %2155 = vdwg.mxu0
      %v2156 = vmax.f32 %v1100, 0.0
      %v2157 = vmax.f32 %v1105, 0.0
      %v2158 = vmax.f32 %v1110, 0.0
      %v2159 = vmax.f32 %v1115, 0.0
      %v2160 = vmax.f32 %v1446, 0.0
      %v2161 = vmax.f32 %v1451, 0.0
      %v2162 = vmax.f32 %v1456, 0.0
      %v2163 = vmax.f32 %v1461, 0.0
      %v2164 = vmax.f32 %v1792, 0.0
      %v2165 = vmax.f32 %v1797, 0.0
      %v2166 = vmax.f32 %v1802, 0.0
      %v2167 = vmax.f32 %v1807, 0.0
      %v2168 = vmax.f32 %v2138, 0.0
      %v2169 = vmax.f32 %v2143, 0.0
      %v2170 = vmax.f32 %v2148, 0.0
      %v2171 = vmax.f32 %v2153, 0.0
      %v2172 = vld [vmem:[%s3] sm:$0xf]
      %v2173 = vld [vmem:[%s3 + $0x4] sm:$0xf]
      %v2174 = vld [vmem:[%s3 + $0x8] sm:$0xf]
      %v2175 = vld [vmem:[%s3 + $0xc] sm:$0xf]
      %v2176 = vunpack.c.l.bf16 %v2172
      %v2177 = vunpack.c.l.bf16 %v2173
      %v2178 = vunpack.c.l.bf16 %v2174
      %v2179 = vunpack.c.l.bf16 %v2175
      %v2180 = vld [vmem:[%s4] sm:$0xff]
      %v2181 = vld [vmem:[%s4 + $0x8] sm:$0xff]
      %v2182 = vld [vmem:[%s4 + $0x10] sm:$0xff]
      %v2183 = vld [vmem:[%s4 + $0x18] sm:$0xff]
      %2185 = vset.pattern.permute.xlu0 0
      %2186 = vperm.xlu0 %2185, %v2180
      %v2187 = vpop.permute.xlu0 %2186
      %2190 = vset.pattern.permute.xlu0 0
      %2191 = vperm.xlu0 %2190, %v2181
      %v2192 = vpop.permute.xlu0 %2191
      %2195 = vset.pattern.permute.xlu0 0
      %2196 = vperm.xlu0 %2195, %v2182
      %v2197 = vpop.permute.xlu0 %2196
      %2200 = vset.pattern.permute.xlu0 0
      %2201 = vperm.xlu0 %2200, %v2183
      %v2202 = vpop.permute.xlu0 %2201
      %2204 = vmatprep.subr.mxu0 0.0
      %2205 = vmatpush1.msra.mxu0 %v2156
      %2206 = vmatprep.subr.mxu0 0.0
      %2207 = vmatpush1.msra.mxu0 %v2157
      %2208 = vmatprep.subr.mxu0 0.0
      %2209 = vmatpush1.msra.mxu0 %v2158
      %2210 = vmatprep.subr.mxu0 0.0
      %2211 = vmatpush1.msra.mxu0 %v2159
      %2212 = vmatprep.subr.mxu0 0.0
      %2213 = vmatpush1.msra.mxu0 %v2160
      %2214 = vmatprep.subr.mxu0 0.0
      %2215 = vmatpush1.msra.mxu0 %v2161
      %2216 = vmatprep.subr.mxu0 0.0
      %2217 = vmatpush1.msra.mxu0 %v2162
      %2218 = vmatprep.subr.mxu0 0.0
      %2219 = vmatpush1.msra.mxu0 %v2163
      %2220 = vmatprep.subr.mxu0 0.0
      %2221 = vmatpush1.msra.mxu0 %v2164
      %2222 = vmatprep.subr.mxu0 0.0
      %2223 = vmatpush1.msra.mxu0 %v2165
      %2224 = vmatprep.subr.mxu0 0.0
      %2225 = vmatpush1.msra.mxu0 %v2166
      %2226 = vmatprep.subr.mxu0 0.0
      %2227 = vmatpush1.msra.mxu0 %v2167
      %2228 = vmatprep.subr.mxu0 0.0
      %2229 = vmatpush1.msra.mxu0 %v2168
      %2230 = vmatprep.subr.mxu0 0.0
      %2231 = vmatpush1.msra.mxu0 %v2169
      %2232 = vmatprep.subr.mxu0 0.0
      %2233 = vmatpush1.msra.mxu0 %v2170
      %2234 = vmatprep.subr.mxu0 0.0
      %2235 = vmatpush1.msra.mxu0 %v2171
      %2236 = vmatprep.subr.mxu0 0.0
      %2237 = vmatpush1.msra.mxu0 0.0
      %2238 = vmatprep.subr.mxu0 0.0
      %2239 = vmatpush1.msra.mxu0 0.0
      %2240 = vmatprep.subr.mxu0 0.0
      %2241 = vmatpush1.msra.mxu0 0.0
      %2242 = vmatprep.subr.mxu0 0.0
      %2243 = vmatpush1.msra.mxu0 0.0
      %2244 = vmatprep.subr.mxu0 0.0
      %2245 = vmatpush1.msra.mxu0 0.0
      %2246 = vmatprep.subr.mxu0 0.0
      %2247 = vmatpush1.msra.mxu0 0.0
      %2248 = vmatprep.subr.mxu0 0.0
      %2249 = vmatpush1.msra.mxu0 0.0
      %2250 = vmatprep.subr.mxu0 0.0
      %2251 = vmatpush1.msra.mxu0 0.0
      %2252 = vmatprep.subr.mxu0 0.0
      %2253 = vmatpush1.msra.mxu0 0.0
      %2254 = vmatprep.subr.mxu0 0.0
      %2255 = vmatpush1.msra.mxu0 0.0
      %2256 = vmatprep.subr.mxu0 0.0
      %2257 = vmatpush1.msra.mxu0 0.0
      %2258 = vmatprep.subr.mxu0 0.0
      %2259 = vmatpush1.msra.mxu0 0.0
      %2260 = vmatprep.subr.mxu0 0.0
      %2261 = vmatpush1.msra.mxu0 0.0
      %2262 = vmatprep.subr.mxu0 0.0
      %2263 = vmatpush1.msra.mxu0 0.0
      %2264 = vmatprep.subr.mxu0 0.0
      %2265 = vmatpush1.msra.mxu0 0.0
      %2266 = vmatprep.subr.mxu0 0.0
      %2267 = vmatpush1.msra.mxu0 0.0
      %2268 = vmatprep.mubr.f32.mxu0 0.0
      %2269 = vmatmul.mubr.f32.gmra.mrb[0].mxu0 %v2176
      %v2270 = vpop.f32.mrb[0].mxu0
      %v2271 = vadd.f32 %v2187, %v2270
      %v2272 = vpop.f32.mrb[0].mxu0
      %2273 = vmatprep.mubr.f32.mxu0 0.0
      %2274 = vmatmul.mubr.f32.gmra.mrb[0].mxu0 %v2177
      %v2275 = vpop.f32.mrb[0].mxu0
      %v2276 = vadd.f32 %v2192, %v2275
      %v2277 = vpop.f32.mrb[0].mxu0
      %2278 = vmatprep.mubr.f32.mxu0 0.0
      %2279 = vmatmul.mubr.f32.gmra.mrb[0].mxu0 %v2178
      %v2280 = vpop.f32.mrb[0].mxu0
      %v2281 = vadd.f32 %v2197, %v2280
      %v2282 = vpop.f32.mrb[0].mxu0
      %2283 = vmatprep.mubr.f32.mxu0 0.0
      %2284 = vmatmul.mubr.f32.gmra.mrb[0].mxu0 %v2179
      %v2285 = vpop.f32.mrb[0].mxu0
      %v2286 = vadd.f32 %v2202, %v2285
      %v2287 = vpop.f32.mrb[0].mxu0
      %2288 = vdwg.mxu0
      %2289 = vst.msk [vmem:[%s224] sm:$0xff] %vm908, %v2271
      %2290 = vst.msk [vmem:[%s224 + $0x8] sm:$0xff] %vm908, %v2276
      %2291 = vst.msk [vmem:[%s224 + $0x10] sm:$0xff] %vm908, %v2281
      %2292 = vst.msk [vmem:[%s224 + $0x18] sm:$0xff] %vm908, %v2286
      %p2293 = scmp.lt.s32.totalorder %s16, 1
      %s2294 = scalar_select %p2293, %s16, 1
      %s2295 = smul.addr %s2294, 4
      %s2296 = smul.addr %s2295, 8
      %s2297 = scalar_lea.vmem %s5, %s2296
      // Predicated region
      $region41: #{attention_pallas.1} parent=39 // pred_check
        %p2298 = pneg %p144
      $region42: #{attention_pallas.1} parent=39 // pred_check_branch
        %2300 = sbr.rel (%p2298) target = $region44
      $region43: #{attention_pallas.1} parent=39 // pred_region
        _
      $region44: #{attention_pallas.1} parent=39 // pred_fallthru
        _
    $region40: #{attention_pallas.1} parent=5 // pred_fallthru
      _
    %p2301 = scmp.le.s32.totalorder 2, %s11
    // Predicated region
    $region45: #{attention_pallas.1} parent=5 // pred_check
      %p2302 = pneg %p2301
    $region46: #{attention_pallas.1} parent=5 // pred_check_branch
      %2304 = sbr.rel (%p2302) target = $region48
    $region47: #{attention_pallas.1} parent=5 // pred_region
      %s2305 = ssub.s32 %s11, 2
      // Predicated region
      $region49: #{attention_pallas.1} parent=47 // pred_check
        %p2306 = pneg %p150
      $region50: #{attention_pallas.1} parent=47 // pred_check_branch
        %2308 = sbr.rel (%p2306) target = $region52
      $region51: #{attention_pallas.1} parent=47 // pred_region
        %p2309 = scmp.lt.s32.totalorder %s17, 1
        %s2310 = scalar_select %p2309, %s17, 1
        %s2311 = smul.addr %s2310, 4
        %s2312 = smul.addr %s2311, 8
        %s2313 = scalar_lea.vmem %s5, %s2312
      $region52: #{attention_pallas.1} parent=47 // pred_fallthru
        _
    $region48: #{attention_pallas.1} parent=5 // pred_fallthru
      _
  $region6: #{attention_pallas.1} parent=0 // loop_footer
    %s15 = sadd.s32 1, %s11
  $region7: #{attention_pallas.1} parent=0 // loop_footer_branch
    %10 = sbr.rel target = $region3
  $region8: #{attention_pallas.1} parent=0 // loop_exit
    _

</llo_original>
